<compile_context>
chip_gen: v6e
topology: v6e:2x2x1
jax: 0.10.0
libtpu: 0.0.40
codegen_flags: <defaults>
</compile_context>

<pallas_src>
import functools
import jax
import jax.numpy as jnp
from jax.experimental import pallas as pl
from jax.experimental.pallas import tpu as pltpu


# ----------------------------- shared math -----------------------------

def _layer_norm(x, g, b, eps=1e-5):
    mu = jnp.mean(x, axis=-1, keepdims=True)
    var = jnp.mean((x - mu) ** 2, axis=-1, keepdims=True)
    return (x - mu) * jax.lax.rsqrt(var + eps) * g + b


def _sigmoid(x):
    return 1.0 / (1.0 + jnp.exp(-x))


def _quick_gelu(x):
    # CLIP's ResidualAttentionBlock uses QuickGELU.
    return x * _sigmoid(1.702 * x)


def _softmax(x):
    m = jnp.max(x, axis=-1, keepdims=True)
    e = jnp.exp(x - m)
    return e / jnp.sum(e, axis=-1, keepdims=True)


# ----------------------------- fused Pallas kernel -----------------------------

def fused_vit_kernel(patches_ref, convw_ref, pre_ref, wqkv_ref, wo_ref,
                     w1_ref, w2_ref, bias_ref, lnpost_ref, proj_ref,
                     out_ref, tok_buf,
                     *, heads, dim, dh, seq, sp, n_patches, mlp, layers, scale):
    """grid = (batch, layers); tok_buf (sp, dim) f32 persists across layers."""
    l = pl.program_id(1)
    bf16 = jnp.bfloat16
    D = dim

    # ---- first layer step: patch embed + cls token + pos embed + ln_pre ----
    @pl.when(l == 0)
    def _init():
        pre = pre_ref[...]                                   # (sp+3, D) f32
        emb = jnp.dot(patches_ref[0].astype(bf16), convw_ref[...],
                      preferred_element_type=jnp.float32)    # (n_patches, D)
        tok_buf[0:1, :] = pre[sp:sp + 1, :]                  # cls token
        tok_buf[1:1 + n_patches, :] = emb
        if sp - 1 - n_patches > 0:                           # pad rows -> 0
            tok_buf[1 + n_patches:sp, :] = jnp.zeros(
                (sp - 1 - n_patches, D), jnp.float32)
        tok0 = tok_buf[...] + pre[0:sp, :]                   # + pos embed
        tok_buf[...] = _layer_norm(tok0, pre[sp + 1:sp + 2, :],
                                   pre[sp + 2:sp + 3, :])

    # ---- unpack this layer's small vectors (single packed slab) ----
    bias = bias_ref[0]                                       # (8, MAXW) f32
    ln1g, ln1b = bias[0:1, :D], bias[1:2, :D]
    ln2g, ln2b = bias[2:3, :D], bias[3:4, :D]
    bo, b2 = bias[4:5, :D], bias[5:6, :D]
    bqkv = bias[6:7, :3 * D]
    b1 = bias[7:8, :mlp]

    tok = tok_buf[...]                                       # (sp, D) f32

    # ---- multi-head self-attention (all heads fused) ----
    h = _layer_norm(tok, ln1g, ln1b)
    qkv = jnp.dot(h.astype(bf16), wqkv_ref[0],
                  preferred_element_type=jnp.float32) + bqkv  # (sp, 3D)

    def split_heads(x):                                       # (sp,D)->(H,sp,dh)
        return jnp.transpose(x.reshape(sp, heads, dh), (1, 0, 2))

    q = split_heads(qkv[:, 0:D])
    k = split_heads(qkv[:, D:2 * D])
    v = split_heads(qkv[:, 2 * D:3 * D])

    s = jnp.einsum("hqe,hke->hqk", q, k,
                   preferred_element_type=jnp.float32) * scale   # (H, sp, sp)
    key_ids = jax.lax.broadcasted_iota(jnp.int32, (1, 1, sp), 2)
    s = jnp.where(key_ids < seq, s, -1e30)                    # mask padded keys
    m = jnp.max(s, axis=-1, keepdims=True)
    e = jnp.exp(s - m)
    p = e * pl.reciprocal(jnp.sum(e, axis=-1, keepdims=True), approx=True)
    o = jnp.einsum("hqk,hke->hqe", p, v,
                   preferred_element_type=jnp.float32)         # (H, sp, dh)
    o = jnp.transpose(o, (1, 0, 2)).reshape(sp, D)
    attn = jnp.dot(o.astype(bf16), wo_ref[0],
                   preferred_element_type=jnp.float32) + bo
    tok = tok + attn

    # ---- MLP (QuickGELU) ----
    h2 = _layer_norm(tok, ln2g, ln2b)
    m1 = jnp.dot(h2.astype(bf16), w1_ref[0],
                 preferred_element_type=jnp.float32) + b1
    m1 = m1 * jax.nn.sigmoid(1.702 * m1)
    mlp_out = jnp.dot(m1.astype(bf16), w2_ref[0],
                      preferred_element_type=jnp.float32) + b2
    tok = tok + mlp_out
    tok_buf[...] = tok

    # ---- last layer step: ln_post(cls token) @ proj ----
    @pl.when(l == layers - 1)
    def _final():
        xc = _layer_norm(tok[0:1, :], lnpost_ref[0:1, :], lnpost_ref[1:2, :])
        out = jnp.dot(xc.astype(bf16), proj_ref[...],
                      preferred_element_type=jnp.float32)      # (1, out_dim)
        out_ref[...] = out.reshape(1, 1, -1)


# ----------------------------- wrapper -----------------------------

def _extract_patches(x, patch):
    B, C, H, W = x.shape
    gh, gw = H // patch, W // patch
    p = x.reshape(B, C, gh, patch, gw, patch)
    p = jnp.transpose(p, (0, 2, 4, 1, 3, 5))  # (B, gh, gw, C, P, P)
    return p.reshape(B, gh * gw, C * patch * patch)


def image_encoder_forward(x, params, *, patch, heads):
    B, C, H, W = x.shape
    dim = params["conv_w"].shape[0]
    dh = dim // heads
    n = (H // patch) * (W // patch)
    seq = n + 1
    sp = max(8, ((seq + 7) // 8) * 8)          # pad seq to sublane multiple
    cpp = C * patch * patch
    mlp = params["blocks"][0]["w1"].shape[1]
    out_dim = params["proj"].shape[1]
    layers = len(params["blocks"])
    scale = dh ** -0.5
    maxw = max(3 * dim, mlp)

    # ---- layout-only glue (no compute): patch extraction + weight packing ----
    patches = _extract_patches(x, patch)                               # (B, n, cpp)
    convw = params["conv_w"].reshape(dim, cpp).T.astype(jnp.bfloat16)  # (cpp, dim)

    pos_pad = jnp.zeros((sp, dim), jnp.float32).at[:seq].set(params["pos"])
    pre_pack = jnp.concatenate(
        [pos_pad, params["cls"][None, :], params["ln_pre_g"],
         params["ln_pre_b"]], axis=0)                                  # (sp+3, dim)

    def fuse_w(w):   # (heads, dim, dh) -> (dim, heads*dh), head-major columns
        return jnp.transpose(w, (1, 0, 2)).reshape(dim, heads * dh)

    def fuse_b(b):   # (heads, 1, dh) -> (1, heads*dh)
        return jnp.transpose(b, (1, 0, 2)).reshape(1, heads * dh)

    wqkv = jnp.stack([jnp.concatenate(
        [fuse_w(b["wq"]), fuse_w(b["wk"]), fuse_w(b["wv"])], axis=1)
        for b in params["blocks"]]).astype(jnp.bfloat16)               # (L, D, 3D)
    wo = jnp.stack([b["wo"].reshape(heads * dh, dim)
                    for b in params["blocks"]]).astype(jnp.bfloat16)   # (L, D, D)
    w1 = jnp.stack([b["w1"] for b in params["blocks"]]).astype(jnp.bfloat16)
    w2 = jnp.stack([b["w2"] for b in params["blocks"]]).astype(jnp.bfloat16)

    def pack_bias(blk):
        rows = jnp.zeros((8, maxw), jnp.float32)
        rows = rows.at[0, :dim].set(blk["ln1g"][0])
        rows = rows.at[1, :dim].set(blk["ln1b"][0])
        rows = rows.at[2, :dim].set(blk["ln2g"][0])
        rows = rows.at[3, :dim].set(blk["ln2b"][0])
        rows = rows.at[4, :dim].set(blk["bo"][0])
        rows = rows.at[5, :dim].set(blk["b2"][0])
        bqkv = jnp.concatenate(
            [fuse_b(blk["bq"]), fuse_b(blk["bk"]), fuse_b(blk["bv"])], axis=1)
        rows = rows.at[6, :3 * dim].set(bqkv[0])
        rows = rows.at[7, :mlp].set(blk["b1"][0])
        return rows

    bias_pack = jnp.stack([pack_bias(b) for b in params["blocks"]])    # (L, 8, maxw)
    lnpost = jnp.concatenate([params["ln_post_g"], params["ln_post_b"]], axis=0)
    proj = params["proj"].astype(jnp.bfloat16)                         # (dim, out)

    kern = functools.partial(
        fused_vit_kernel, heads=heads, dim=dim, dh=dh, seq=seq, sp=sp,
        n_patches=n, mlp=mlp, layers=layers, scale=scale)

    out = pl.pallas_call(
        kern,
        out_shape=jax.ShapeDtypeStruct((B, 1, out_dim), jnp.float32),
        grid=(B, layers),
        in_specs=[
            pl.BlockSpec((1, n, cpp), lambda b, l: (b, 0, 0)),        # patches
            pl.BlockSpec((cpp, dim), lambda b, l: (0, 0)),            # conv_w
            pl.BlockSpec((sp + 3, dim), lambda b, l: (0, 0)),         # pre pack
            pl.BlockSpec((1, dim, 3 * dim), lambda b, l: (l, 0, 0)),  # wqkv
            pl.BlockSpec((1, dim, dim), lambda b, l: (l, 0, 0)),      # wo
            pl.BlockSpec((1, dim, mlp), lambda b, l: (l, 0, 0)),      # w1
            pl.BlockSpec((1, mlp, dim), lambda b, l: (l, 0, 0)),      # w2
            pl.BlockSpec((1, 8, maxw), lambda b, l: (l, 0, 0)),       # bias pack
            pl.BlockSpec((2, dim), lambda b, l: (0, 0)),              # ln_post
            pl.BlockSpec((dim, out_dim), lambda b, l: (0, 0)),        # proj
        ],
        out_specs=pl.BlockSpec((1, 1, out_dim), lambda b, l: (b, 0, 0)),
        scratch_shapes=[pltpu.VMEM((sp, dim), jnp.float32)],
        compiler_params=pltpu.CompilerParams(
            dimension_semantics=("parallel", "arbitrary")),
    )(patches, convw, pre_pack, wqkv, wo, w1, w2, bias_pack, lnpost, proj)
    return out.reshape(B, out_dim)


# ----------------------------- pure-JAX reference -----------------------------

def _block_math_ref(x, p, *, n_heads, scale):
    """Per-head reference (matches PyTorch MHA semantics), pure f32."""
    B, S, D = x.shape
    h = _layer_norm(x, p["ln1g"], p["ln1b"])
    hf = h.reshape(B * S, D)
    attn = jnp.zeros((B * S, D), jnp.float32)
    for hd in range(n_heads):
        q = (hf @ p["wq"][hd] + p["bq"][hd]).reshape(B, S, -1)
        k = (hf @ p["wk"][hd] + p["bk"][hd]).reshape(B, S, -1)
        v = (hf @ p["wv"][hd] + p["bv"][hd]).reshape(B, S, -1)
        s = jnp.einsum("bqe,bke->bqk", q, k) * scale
        w = _softmax(s)
        oh = jnp.einsum("bqk,bke->bqe", w, v)
        attn = attn + oh.reshape(B * S, -1) @ p["wo"][hd]
    x = x + attn.reshape(B, S, D) + p["bo"]
    h2 = _layer_norm(x, p["ln2g"], p["ln2b"]).reshape(B * S, D)
    m = _quick_gelu(h2 @ p["w1"] + p["b1"])
    m = m @ p["w2"] + p["b2"]
    return x + m.reshape(B, S, D)


def reference_forward(x, params, *, patch, heads):
    B = x.shape[0]
    dim = params["conv_w"].shape[0]
    scale = (dim // heads) ** -0.5
    patches = _extract_patches(x, patch)
    emb = patches @ params["conv_w"].reshape(dim, -1).T
    cls = jnp.broadcast_to(params["cls"][None, None, :], (B, 1, dim))
    tok = jnp.concatenate([cls, emb], axis=1) + params["pos"]
    tok = _layer_norm(tok, params["ln_pre_g"], params["ln_pre_b"])
    for blk in params["blocks"]:
        tok = _block_math_ref(tok, blk, n_heads=heads, scale=scale)
    x_cls = _layer_norm(tok[:, 0, :], params["ln_post_g"], params["ln_post_b"])
    return x_cls @ params["proj"]


# ----------------------------- synthetic parameters -----------------------------

def init_params(key, *, in_ch, patch, dim, heads, mlp_dim, layers, out_dim, seq):
    dh = dim // heads
    s = 0.02
    ks = iter(jax.random.split(key, 8 + 12 * layers))

    def rnd(shape):
        return jax.random.normal(next(ks), shape, jnp.float32) * s

    params = {
        "conv_w": rnd((dim, in_ch, patch, patch)),
        "cls": rnd((dim,)),
        "pos": rnd((seq, dim)),
        "ln_pre_g": jnp.ones((1, dim), jnp.float32),
        "ln_pre_b": jnp.zeros((1, dim), jnp.float32),
        "ln_post_g": jnp.ones((1, dim), jnp.float32),
        "ln_post_b": jnp.zeros((1, dim), jnp.float32),
        "proj": rnd((dim, out_dim)),
        "blocks": [],
    }
    for _ in range(layers):
        params["blocks"].append({
            "ln1g": jnp.ones((1, dim), jnp.float32),
            "ln1b": jnp.zeros((1, dim), jnp.float32),
            "wq": rnd((heads, dim, dh)),
            "wk": rnd((heads, dim, dh)),
            "wv": rnd((heads, dim, dh)),
            "bq": rnd((heads, 1, dh)),
            "bk": rnd((heads, 1, dh)),
            "bv": rnd((heads, 1, dh)),
            "wo": rnd((heads, dh, dim)),
            "bo": rnd((1, dim)),
            "ln2g": jnp.ones((1, dim), jnp.float32),
            "ln2b": jnp.zeros((1, dim), jnp.float32),
            "w1": rnd((dim, mlp_dim)),
            "b1": rnd((1, mlp_dim)),
            "w2": rnd((mlp_dim, dim)),
            "b2": rnd((1, dim)),
        })
    return params


# ----------------------------- main -----------------------------

if __name__ == "__main__":
    B, C, H, W = 2, 3, 16, 16          # NCHW image input, like the PyTorch module
    PATCH, DIM, HEADS = 8, 64, 4       # vision_patch_size / vision_width / heads
    MLP, LAYERS, OUT = 256, 2, 32      # mlp hidden, transformer.layers, output_dim
    SEQ = (H // PATCH) * (W // PATCH) + 1

    key = jax.random.PRNGKey(0)
    kx, kp = jax.random.split(key)
    x = jax.random.normal(kx, (B, C, H, W), jnp.float32)
    params = init_params(kp, in_ch=C, patch=PATCH, dim=DIM, heads=HEADS,
                         mlp_dim=MLP, layers=LAYERS, out_dim=OUT, seq=SEQ)

    out = image_encoder_forward(x, params, patch=PATCH, heads=HEADS)
    out = jax.block_until_ready(out)

    ref = reference_forward(x, params, patch=PATCH, heads=HEADS)
    assert out.shape == (B, OUT), out.shape
    assert bool(jnp.all(jnp.isfinite(out)))
    assert bool(jnp.allclose(out, ref, rtol=2e-2, atol=2e-2)), \
        float(jnp.max(jnp.abs(out - ref)))

    print("KERNEL_OK")
</pallas_src>

<mosaic_0001>
module attributes {stable_mosaic.version = 11 : i64} {
  func.func @fused_vit_kernel(%arg0: i32, %arg1: i32, %arg2: memref<1x4x192xf32, #tpu.memory_space<vmem>>, %arg3: memref<192x64xbf16, #tpu.memory_space<vmem>>, %arg4: memref<11x64xf32, #tpu.memory_space<vmem>>, %arg5: memref<1x64x192xbf16, #tpu.memory_space<vmem>>, %arg6: memref<1x64x64xbf16, #tpu.memory_space<vmem>>, %arg7: memref<1x64x256xbf16, #tpu.memory_space<vmem>>, %arg8: memref<1x256x64xbf16, #tpu.memory_space<vmem>>, %arg9: memref<1x8x256xf32, #tpu.memory_space<vmem>>, %arg10: memref<2x64xf32, #tpu.memory_space<vmem>>, %arg11: memref<64x32xbf16, #tpu.memory_space<vmem>>, %arg12: memref<1x1x32xf32, #tpu.memory_space<vmem>>, %arg13: memref<8x64xf32, #tpu.memory_space<vmem>>) attributes {dimension_semantics = [#tpu.dimension_semantics<parallel>, #tpu.dimension_semantics<arbitrary>], iteration_bounds = array<i64: 2, 2>, scalar_prefetch = 0 : i64, scratch_operands = 1 : i64, tpu.core_type = #tpu.core_type<tc>, window_params = [{transform_indices = @transform_0, window_bounds = array<i64: 1, 4, 192>}, {pipeline_mode = #tpu.pipeline_mode<synchronous>, transform_indices = @transform_1, window_bounds = array<i64: 192, 64>}, {pipeline_mode = #tpu.pipeline_mode<synchronous>, transform_indices = @transform_2, window_bounds = array<i64: 11, 64>}, {transform_indices = @transform_3, window_bounds = array<i64: 1, 64, 192>}, {transform_indices = @transform_4, window_bounds = array<i64: 1, 64, 64>}, {transform_indices = @transform_5, window_bounds = array<i64: 1, 64, 256>}, {transform_indices = @transform_6, window_bounds = array<i64: 1, 256, 64>}, {transform_indices = @transform_7, window_bounds = array<i64: 1, 8, 256>}, {pipeline_mode = #tpu.pipeline_mode<synchronous>, transform_indices = @transform_8, window_bounds = array<i64: 2, 64>}, {pipeline_mode = #tpu.pipeline_mode<synchronous>, transform_indices = @transform_9, window_bounds = array<i64: 64, 32>}, {transform_indices = @transform_10, window_bounds = array<i64: 1, 1, 32>}]} {
    %c0_i32 = arith.constant 0 : i32
    %0 = arith.cmpi eq, %arg1, %c0_i32 : i32
    %1 = arith.extui %0 : i1 to i32
    %c0_i32_0 = arith.constant 0 : i32
    %2 = arith.cmpi ne, %1, %c0_i32_0 : i32
    scf.if %2 {
      %c0_41 = arith.constant 0 : index
      %c0_42 = arith.constant 0 : index
      %128 = vector.load %arg4[%c0_41, %c0_42] : memref<11x64xf32, #tpu.memory_space<vmem>>, vector<11x64xf32>
      %c0_43 = arith.constant 0 : index
      %c0_44 = arith.constant 0 : index
      %c0_45 = arith.constant 0 : index
      %129 = vector.load %arg2[%c0_43, %c0_44, %c0_45] : memref<1x4x192xf32, #tpu.memory_space<vmem>>, vector<1x4x192xf32>
      %130 = vector.shape_cast %129 : vector<1x4x192xf32> to vector<4x192xf32>
      %131 = arith.truncf %130 : vector<4x192xf32> to vector<4x192xbf16>
      %c0_46 = arith.constant 0 : index
      %c0_47 = arith.constant 0 : index
      %132 = vector.load %arg3[%c0_46, %c0_47] : memref<192x64xbf16, #tpu.memory_space<vmem>>, vector<192x64xbf16>
      %cst_48 = arith.constant dense<0.000000e+00> : vector<4x64xf32>
      %133 = tpu.matmul %131, %132, %cst_48 {dimension_numbers = #tpu.dot_dimension_numbers<[1], [0], [0], [1], [0, 0, 1, 1], [], []>} : vector<4x192xbf16>, vector<192x64xbf16>, vector<4x64xf32> -> vector<4x64xf32>
      %134 = vector.extract_strided_slice %128 {offsets = [8, 0], sizes = [1, 64], strides = [1, 1]} : vector<11x64xf32> to vector<1x64xf32>
      %c0_49 = arith.constant 0 : index
      %c0_50 = arith.constant 0 : index
      %135 = vector.load %arg13[%c0_49, %c0_50] : memref<8x64xf32, #tpu.memory_space<vmem>>, vector<1x64xf32>
      tpu.vector_store %arg13[%c0_49, %c0_50], %134 {strides = array<i32>} : memref<8x64xf32, #tpu.memory_space<vmem>>, vector<1x64xf32>,
      %c1 = arith.constant 1 : index
      %c0_51 = arith.constant 0 : index
      %136 = vector.load %arg13[%c1, %c0_51] : memref<8x64xf32, #tpu.memory_space<vmem>>, vector<4x64xf32>
      tpu.vector_store %arg13[%c1, %c0_51], %133 {strides = array<i32>} : memref<8x64xf32, #tpu.memory_space<vmem>>, vector<4x64xf32>,
      %cst_52 = arith.constant 0.000000e+00 : f32
      %137 = vector.broadcast %cst_52 : f32 to vector<3x64xf32>
      %c5 = arith.constant 5 : index
      %c0_53 = arith.constant 0 : index
      %138 = vector.load %arg13[%c5, %c0_53] : memref<8x64xf32, #tpu.memory_space<vmem>>, vector<3x64xf32>
      tpu.vector_store %arg13[%c5, %c0_53], %137 {strides = array<i32>} : memref<8x64xf32, #tpu.memory_space<vmem>>, vector<3x64xf32>,
      %c0_54 = arith.constant 0 : index
      %c0_55 = arith.constant 0 : index
      %139 = vector.load %arg13[%c0_54, %c0_55] : memref<8x64xf32, #tpu.memory_space<vmem>>, vector<8x64xf32>
      %140 = vector.extract_strided_slice %128 {offsets = [0, 0], sizes = [8, 64], strides = [1, 1]} : vector<11x64xf32> to vector<8x64xf32>
      %141 = arith.addf %139, %140 : vector<8x64xf32>
      %142 = vector.extract_strided_slice %128 {offsets = [9, 0], sizes = [1, 64], strides = [1, 1]} : vector<11x64xf32> to vector<1x64xf32>
      %143 = vector.extract_strided_slice %128 {offsets = [10, 0], sizes = [1, 64], strides = [1, 1]} : vector<11x64xf32> to vector<1x64xf32>
      %cst_56 = arith.constant dense<0.000000e+00> : vector<8xf32>
      %144 = vector.multi_reduction <add>, %141, %cst_56 [1] : vector<8x64xf32> to vector<8xf32>
      %145 = vector.shape_cast %144 : vector<8xf32> to vector<8x1xf32>
      %cst_57 = arith.constant 6.400000e+01 : f32
      %146 = vector.broadcast %cst_57 : f32 to vector<8x1xf32>
      %147 = arith.divf %145, %146 : vector<8x1xf32>
      %148 = vector.broadcast %147 : vector<8x1xf32> to vector<8x64xf32>
      %149 = arith.subf %141, %148 : vector<8x64xf32>
      %150 = arith.mulf %149, %149 : vector<8x64xf32>
      %cst_58 = arith.constant dense<0.000000e+00> : vector<8xf32>
      %151 = vector.multi_reduction <add>, %150, %cst_58 [1] : vector<8x64xf32> to vector<8xf32>
      %152 = vector.shape_cast %151 : vector<8xf32> to vector<8x1xf32>
      %cst_59 = arith.constant 6.400000e+01 : f32
      %153 = vector.broadcast %cst_59 : f32 to vector<8x1xf32>
      %154 = arith.divf %152, %153 : vector<8x1xf32>
      %155 = vector.broadcast %147 : vector<8x1xf32> to vector<8x64xf32>
      %156 = arith.subf %141, %155 : vector<8x64xf32>
      %cst_60 = arith.constant 9.99999974E-6 : f32
      %157 = vector.broadcast %cst_60 : f32 to vector<8x1xf32>
      %158 = arith.addf %154, %157 : vector<8x1xf32>
      %159 = math.rsqrt %158 : vector<8x1xf32>
      %160 = vector.broadcast %159 : vector<8x1xf32> to vector<8x64xf32>
      %161 = arith.mulf %156, %160 : vector<8x64xf32>
      %162 = vector.broadcast %142 : vector<1x64xf32> to vector<8x64xf32>
      %163 = arith.mulf %161, %162 : vector<8x64xf32>
      %164 = vector.broadcast %143 : vector<1x64xf32> to vector<8x64xf32>
      %165 = arith.addf %163, %164 : vector<8x64xf32>
      %c0_61 = arith.constant 0 : index
      %c0_62 = arith.constant 0 : index
      %166 = vector.load %arg13[%c0_61, %c0_62] : memref<8x64xf32, #tpu.memory_space<vmem>>, vector<8x64xf32>
      tpu.vector_store %arg13[%c0_61, %c0_62], %165 {strides = array<i32>} : memref<8x64xf32, #tpu.memory_space<vmem>>, vector<8x64xf32>,
    } else {
    }
    %c0 = arith.constant 0 : index
    %c0_1 = arith.constant 0 : index
    %c0_2 = arith.constant 0 : index
    %3 = vector.load %arg9[%c0, %c0_1, %c0_2] : memref<1x8x256xf32, #tpu.memory_space<vmem>>, vector<1x8x256xf32>
    %4 = vector.shape_cast %3 : vector<1x8x256xf32> to vector<8x256xf32>
    %5 = vector.extract_strided_slice %4 {offsets = [0, 0], sizes = [1, 64], strides = [1, 1]} : vector<8x256xf32> to vector<1x64xf32>
    %6 = vector.extract_strided_slice %4 {offsets = [1, 0], sizes = [1, 64], strides = [1, 1]} : vector<8x256xf32> to vector<1x64xf32>
    %7 = vector.extract_strided_slice %4 {offsets = [2, 0], sizes = [1, 64], strides = [1, 1]} : vector<8x256xf32> to vector<1x64xf32>
    %8 = vector.extract_strided_slice %4 {offsets = [3, 0], sizes = [1, 64], strides = [1, 1]} : vector<8x256xf32> to vector<1x64xf32>
    %9 = vector.extract_strided_slice %4 {offsets = [4, 0], sizes = [1, 64], strides = [1, 1]} : vector<8x256xf32> to vector<1x64xf32>
    %10 = vector.extract_strided_slice %4 {offsets = [5, 0], sizes = [1, 64], strides = [1, 1]} : vector<8x256xf32> to vector<1x64xf32>
    %11 = vector.extract_strided_slice %4 {offsets = [6, 0], sizes = [1, 192], strides = [1, 1]} : vector<8x256xf32> to vector<1x192xf32>
    %12 = vector.extract_strided_slice %4 {offsets = [7, 0], sizes = [1, 256], strides = [1, 1]} : vector<8x256xf32> to vector<1x256xf32>
    %c0_3 = arith.constant 0 : index
    %c0_4 = arith.constant 0 : index
    %13 = vector.load %arg13[%c0_3, %c0_4] : memref<8x64xf32, #tpu.memory_space<vmem>>, vector<8x64xf32>
    %cst = arith.constant dense<0.000000e+00> : vector<8xf32>
    %14 = vector.multi_reduction <add>, %13, %cst [1] : vector<8x64xf32> to vector<8xf32>
    %15 = vector.shape_cast %14 : vector<8xf32> to vector<8x1xf32>
    %cst_5 = arith.constant 6.400000e+01 : f32
    %16 = vector.broadcast %cst_5 : f32 to vector<8x1xf32>
    %17 = arith.divf %15, %16 : vector<8x1xf32>
    %18 = vector.broadcast %17 : vector<8x1xf32> to vector<8x64xf32>
    %19 = arith.subf %13, %18 : vector<8x64xf32>
    %20 = arith.mulf %19, %19 : vector<8x64xf32>
    %cst_6 = arith.constant dense<0.000000e+00> : vector<8xf32>
    %21 = vector.multi_reduction <add>, %20, %cst_6 [1] : vector<8x64xf32> to vector<8xf32>
    %22 = vector.shape_cast %21 : vector<8xf32> to vector<8x1xf32>
    %cst_7 = arith.constant 6.400000e+01 : f32
    %23 = vector.broadcast %cst_7 : f32 to vector<8x1xf32>
    %24 = arith.divf %22, %23 : vector<8x1xf32>
    %25 = vector.broadcast %17 : vector<8x1xf32> to vector<8x64xf32>
    %26 = arith.subf %13, %25 : vector<8x64xf32>
    %cst_8 = arith.constant 9.99999974E-6 : f32
    %27 = vector.broadcast %cst_8 : f32 to vector<8x1xf32>
    %28 = arith.addf %24, %27 : vector<8x1xf32>
    %29 = math.rsqrt %28 : vector<8x1xf32>
    %30 = vector.broadcast %29 : vector<8x1xf32> to vector<8x64xf32>
    %31 = arith.mulf %26, %30 : vector<8x64xf32>
    %32 = vector.broadcast %5 : vector<1x64xf32> to vector<8x64xf32>
    %33 = arith.mulf %31, %32 : vector<8x64xf32>
    %34 = vector.broadcast %6 : vector<1x64xf32> to vector<8x64xf32>
    %35 = arith.addf %33, %34 : vector<8x64xf32>
    %36 = arith.truncf %35 : vector<8x64xf32> to vector<8x64xbf16>
    %c0_9 = arith.constant 0 : index
    %c0_10 = arith.constant 0 : index
    %c0_11 = arith.constant 0 : index
    %37 = vector.load %arg5[%c0_9, %c0_10, %c0_11] : memref<1x64x192xbf16, #tpu.memory_space<vmem>>, vector<1x64x192xbf16>
    %38 = vector.shape_cast %37 : vector<1x64x192xbf16> to vector<64x192xbf16>
    %cst_12 = arith.constant dense<0.000000e+00> : vector<8x192xf32>
    %39 = tpu.matmul %36, %38, %cst_12 {dimension_numbers = #tpu.dot_dimension_numbers<[1], [0], [0], [1], [0, 0, 1, 1], [], []>} : vector<8x64xbf16>, vector<64x192xbf16>, vector<8x192xf32> -> vector<8x192xf32>
    %40 = vector.broadcast %11 : vector<1x192xf32> to vector<8x192xf32>
    %41 = arith.addf %39, %40 : vector<8x192xf32>
    %42 = vector.extract_strided_slice %41 {offsets = [0, 0], sizes = [8, 64], strides = [1, 1]} : vector<8x192xf32> to vector<8x64xf32>
    %43 = vector.shape_cast %42 : vector<8x64xf32> to vector<8x4x16xf32>
    %44 = tpu.transpose %43, [1, 0, 2] : vector<8x4x16xf32> -> vector<4x8x16xf32>
    %45 = vector.extract_strided_slice %41 {offsets = [0, 64], sizes = [8, 64], strides = [1, 1]} : vector<8x192xf32> to vector<8x64xf32>
    %46 = vector.shape_cast %45 : vector<8x64xf32> to vector<8x4x16xf32>
    %47 = tpu.transpose %46, [1, 0, 2] : vector<8x4x16xf32> -> vector<4x8x16xf32>
    %48 = vector.extract_strided_slice %41 {offsets = [0, 128], sizes = [8, 64], strides = [1, 1]} : vector<8x192xf32> to vector<8x64xf32>
    %49 = vector.shape_cast %48 : vector<8x64xf32> to vector<8x4x16xf32>
    %50 = tpu.transpose %49, [1, 0, 2] : vector<8x4x16xf32> -> vector<4x8x16xf32>
    "tpu.trace_start"() <{level = 10 : i32, message = "hqe,hke->hqk"}> : () -> ()
    %cst_13 = arith.constant dense<0.000000e+00> : vector<4x8x8xf32>
    %51 = tpu.matmul %44, %47, %cst_13 {dimension_numbers = #tpu.dot_dimension_numbers<[2], [2], [1], [1], [0, 0, 0, 1, 1, 1], [0], [0]>} : vector<4x8x16xf32>, vector<4x8x16xf32>, vector<4x8x8xf32> -> vector<4x8x8xf32>
    "tpu.trace_stop"() : () -> ()
    %cst_14 = arith.constant 2.500000e-01 : f32
    %52 = vector.broadcast %cst_14 : f32 to vector<4x8x8xf32>
    %53 = arith.mulf %51, %52 : vector<4x8x8xf32>
    %54 = tpu.iota {dimensions = array<i32: 2>} : vector<1x1x8xi32>
    %c5_i32 = arith.constant 5 : i32
    %55 = vector.broadcast %c5_i32 : i32 to vector<1x1x8xi32>
    %56 = arith.cmpi slt, %54, %55 : vector<1x1x8xi32>
    %cst_15 = arith.constant -1.000000e+30 : f32
    %57 = vector.shape_cast %56 : vector<1x1x8xi1> to vector<1x1x8xi1>
    %58 = vector.broadcast %57 : vector<1x1x8xi1> to vector<4x8x8xi1>
    %59 = vector.broadcast %cst_15 : f32 to vector<4x8x8xf32>
    %60 = arith.select %58, %53, %59 : vector<4x8x8xi1>, vector<4x8x8xf32>
    %cst_16 = arith.constant dense<0xFF800000> : vector<4x8xf32>
    %61 = vector.multi_reduction <maximumf>, %60, %cst_16 [2] : vector<4x8x8xf32> to vector<4x8xf32>
    %62 = vector.shape_cast %61 : vector<4x8xf32> to vector<4x8x1xf32>
    %63 = vector.broadcast %62 : vector<4x8x1xf32> to vector<4x8x8xf32>
    %64 = arith.subf %60, %63 : vector<4x8x8xf32>
    %65 = math.exp %64 : vector<4x8x8xf32>
    %cst_17 = arith.constant dense<0.000000e+00> : vector<4x8xf32>
    %66 = vector.multi_reduction <add>, %65, %cst_17 [2] : vector<4x8x8xf32> to vector<4x8xf32>
    %67 = vector.shape_cast %66 : vector<4x8xf32> to vector<4x8x1xf32>
    %68 = tpu.reciprocal %67 {approx = true} : vector<4x8x1xf32> -> vector<4x8x1xf32>
    %69 = vector.broadcast %68 : vector<4x8x1xf32> to vector<4x8x8xf32>
    %70 = arith.mulf %65, %69 : vector<4x8x8xf32>
    "tpu.trace_start"() <{level = 10 : i32, message = "hqk,hke->hqe"}> : () -> ()
    %cst_18 = arith.constant dense<0.000000e+00> : vector<4x8x16xf32>
    %71 = tpu.matmul %70, %50, %cst_18 {dimension_numbers = #tpu.dot_dimension_numbers<[2], [1], [1], [2], [0, 0, 0, 1, 1, 2], [0], [0]>} : vector<4x8x8xf32>, vector<4x8x16xf32>, vector<4x8x16xf32> -> vector<4x8x16xf32>
    "tpu.trace_stop"() : () -> ()
    %72 = tpu.transpose %71, [1, 0, 2] : vector<4x8x16xf32> -> vector<8x4x16xf32>
    %73 = vector.shape_cast %72 : vector<8x4x16xf32> to vector<8x64xf32>
    %74 = arith.truncf %73 : vector<8x64xf32> to vector<8x64xbf16>
    %c0_19 = arith.constant 0 : index
    %c0_20 = arith.constant 0 : index
    %c0_21 = arith.constant 0 : index
    %75 = vector.load %arg6[%c0_19, %c0_20, %c0_21] : memref<1x64x64xbf16, #tpu.memory_space<vmem>>, vector<1x64x64xbf16>
    %76 = vector.shape_cast %75 : vector<1x64x64xbf16> to vector<64x64xbf16>
    %cst_22 = arith.constant dense<0.000000e+00> : vector<8x64xf32>
    %77 = tpu.matmul %74, %76, %cst_22 {dimension_numbers = #tpu.dot_dimension_numbers<[1], [0], [0], [1], [0, 0, 1, 1], [], []>} : vector<8x64xbf16>, vector<64x64xbf16>, vector<8x64xf32> -> vector<8x64xf32>
    %78 = vector.broadcast %9 : vector<1x64xf32> to vector<8x64xf32>
    %79 = arith.addf %77, %78 : vector<8x64xf32>
    %80 = arith.addf %13, %79 : vector<8x64xf32>
    %cst_23 = arith.constant dense<0.000000e+00> : vector<8xf32>
    %81 = vector.multi_reduction <add>, %80, %cst_23 [1] : vector<8x64xf32> to vector<8xf32>
    %82 = vector.shape_cast %81 : vector<8xf32> to vector<8x1xf32>
    %cst_24 = arith.constant 6.400000e+01 : f32
    %83 = vector.broadcast %cst_24 : f32 to vector<8x1xf32>
    %84 = arith.divf %82, %83 : vector<8x1xf32>
    %85 = vector.broadcast %84 : vector<8x1xf32> to vector<8x64xf32>
    %86 = arith.subf %80, %85 : vector<8x64xf32>
    %87 = arith.mulf %86, %86 : vector<8x64xf32>
    %cst_25 = arith.constant dense<0.000000e+00> : vector<8xf32>
    %88 = vector.multi_reduction <add>, %87, %cst_25 [1] : vector<8x64xf32> to vector<8xf32>
    %89 = vector.shape_cast %88 : vector<8xf32> to vector<8x1xf32>
    %cst_26 = arith.constant 6.400000e+01 : f32
    %90 = vector.broadcast %cst_26 : f32 to vector<8x1xf32>
    %91 = arith.divf %89, %90 : vector<8x1xf32>
    %92 = vector.broadcast %84 : vector<8x1xf32> to vector<8x64xf32>
    %93 = arith.subf %80, %92 : vector<8x64xf32>
    %cst_27 = arith.constant 9.99999974E-6 : f32
    %94 = vector.broadcast %cst_27 : f32 to vector<8x1xf32>
    %95 = arith.addf %91, %94 : vector<8x1xf32>
    %96 = math.rsqrt %95 : vector<8x1xf32>
    %97 = vector.broadcast %96 : vector<8x1xf32> to vector<8x64xf32>
    %98 = arith.mulf %93, %97 : vector<8x64xf32>
    %99 = vector.broadcast %7 : vector<1x64xf32> to vector<8x64xf32>
    %100 = arith.mulf %98, %99 : vector<8x64xf32>
    %101 = vector.broadcast %8 : vector<1x64xf32> to vector<8x64xf32>
    %102 = arith.addf %100, %101 : vector<8x64xf32>
    %103 = arith.truncf %102 : vector<8x64xf32> to vector<8x64xbf16>
    %c0_28 = arith.constant 0 : index
    %c0_29 = arith.constant 0 : index
    %c0_30 = arith.constant 0 : index
    %104 = vector.load %arg7[%c0_28, %c0_29, %c0_30] : memref<1x64x256xbf16, #tpu.memory_space<vmem>>, vector<1x64x256xbf16>
    %105 = vector.shape_cast %104 : vector<1x64x256xbf16> to vector<64x256xbf16>
    %cst_31 = arith.constant dense<0.000000e+00> : vector<8x256xf32>
    %106 = tpu.matmul %103, %105, %cst_31 {dimension_numbers = #tpu.dot_dimension_numbers<[1], [0], [0], [1], [0, 0, 1, 1], [], []>} : vector<8x64xbf16>, vector<64x256xbf16>, vector<8x256xf32> -> vector<8x256xf32>
    %107 = vector.broadcast %12 : vector<1x256xf32> to vector<8x256xf32>
    %108 = arith.addf %106, %107 : vector<8x256xf32>
    %cst_32 = arith.constant 1.702000e+00 : f32
    %109 = vector.broadcast %cst_32 : f32 to vector<8x256xf32>
    %110 = arith.mulf %109, %108 : vector<8x256xf32>
    %111 = arith.negf %110 : vector<8x256xf32>
    %112 = math.exp %111 : vector<8x256xf32>
    %cst_33 = arith.constant 1.000000e+00 : f32
    %113 = vector.broadcast %cst_33 : f32 to vector<8x256xf32>
    %114 = arith.addf %113, %112 : vector<8x256xf32>
    %115 = arith.divf %113, %114 : vector<8x256xf32>
    %116 = arith.mulf %108, %115 : vector<8x256xf32>
    %117 = arith.truncf %116 : vector<8x256xf32> to vector<8x256xbf16>
    %c0_34 = arith.constant 0 : index
    %c0_35 = arith.constant 0 : index
    %c0_36 = arith.constant 0 : index
    %118 = vector.load %arg8[%c0_34, %c0_35, %c0_36] : memref<1x256x64xbf16, #tpu.memory_space<vmem>>, vector<1x256x64xbf16>
    %119 = vector.shape_cast %118 : vector<1x256x64xbf16> to vector<256x64xbf16>
    %cst_37 = arith.constant dense<0.000000e+00> : vector<8x64xf32>
    %120 = tpu.matmul %117, %119, %cst_37 {dimension_numbers = #tpu.dot_dimension_numbers<[1], [0], [0], [1], [0, 0, 1, 1], [], []>} : vector<8x256xbf16>, vector<256x64xbf16>, vector<8x64xf32> -> vector<8x64xf32>
    %121 = vector.broadcast %10 : vector<1x64xf32> to vector<8x64xf32>
    %122 = arith.addf %120, %121 : vector<8x64xf32>
    %123 = arith.addf %80, %122 : vector<8x64xf32>
    %c0_38 = arith.constant 0 : index
    %c0_39 = arith.constant 0 : index
    %124 = vector.load %arg13[%c0_38, %c0_39] : memref<8x64xf32, #tpu.memory_space<vmem>>, vector<8x64xf32>
    tpu.vector_store %arg13[%c0_38, %c0_39], %123 {strides = array<i32>} : memref<8x64xf32, #tpu.memory_space<vmem>>, vector<8x64xf32>,
    %c1_i32 = arith.constant 1 : i32
    %125 = arith.cmpi eq, %arg1, %c1_i32 : i32
    %126 = arith.extui %125 : i1 to i32
    %c0_i32_40 = arith.constant 0 : i32
    %127 = arith.cmpi ne, %126, %c0_i32_40 : i32
    scf.if %127 {
      %128 = vector.extract_strided_slice %123 {offsets = [0, 0], sizes = [1, 64], strides = [1, 1]} : vector<8x64xf32> to vector<1x64xf32>
      %c0_41 = arith.constant 0 : index
      %c0_42 = arith.constant 0 : index
      %129 = vector.load %arg10[%c0_41, %c0_42] : memref<2x64xf32, #tpu.memory_space<vmem>>, vector<1x64xf32>
      %c1 = arith.constant 1 : index
      %c0_43 = arith.constant 0 : index
      %130 = vector.load %arg10[%c1, %c0_43] : memref<2x64xf32, #tpu.memory_space<vmem>>, vector<1x64xf32>
      %cst_44 = arith.constant dense<0.000000e+00> : vector<1xf32>
      %131 = vector.multi_reduction <add>, %128, %cst_44 [1] : vector<1x64xf32> to vector<1xf32>
      %132 = vector.shape_cast %131 : vector<1xf32> to vector<1x1xf32>
      %cst_45 = arith.constant 6.400000e+01 : f32
      %133 = vector.broadcast %cst_45 : f32 to vector<1x1xf32>
      %134 = arith.divf %132, %133 : vector<1x1xf32>
      %135 = vector.broadcast %134 : vector<1x1xf32> to vector<1x64xf32>
      %136 = arith.subf %128, %135 : vector<1x64xf32>
      %137 = arith.mulf %136, %136 : vector<1x64xf32>
      %cst_46 = arith.constant dense<0.000000e+00> : vector<1xf32>
      %138 = vector.multi_reduction <add>, %137, %cst_46 [1] : vector<1x64xf32> to vector<1xf32>
      %139 = vector.shape_cast %138 : vector<1xf32> to vector<1x1xf32>
      %cst_47 = arith.constant 6.400000e+01 : f32
      %140 = vector.broadcast %cst_47 : f32 to vector<1x1xf32>
      %141 = arith.divf %139, %140 : vector<1x1xf32>
      %142 = vector.broadcast %134 : vector<1x1xf32> to vector<1x64xf32>
      %143 = arith.subf %128, %142 : vector<1x64xf32>
      %cst_48 = arith.constant 9.99999974E-6 : f32
      %144 = vector.broadcast %cst_48 : f32 to vector<1x1xf32>
      %145 = arith.addf %141, %144 : vector<1x1xf32>
      %146 = math.rsqrt %145 : vector<1x1xf32>
      %147 = vector.broadcast %146 : vector<1x1xf32> to vector<1x64xf32>
      %148 = arith.mulf %143, %147 : vector<1x64xf32>
      %149 = arith.mulf %148, %129 : vector<1x64xf32>
      %150 = arith.addf %149, %130 : vector<1x64xf32>
      %151 = arith.truncf %150 : vector<1x64xf32> to vector<1x64xbf16>
      %c0_49 = arith.constant 0 : index
      %c0_50 = arith.constant 0 : index
      %152 = vector.load %arg11[%c0_49, %c0_50] : memref<64x32xbf16, #tpu.memory_space<vmem>>, vector<64x32xbf16>
      %cst_51 = arith.constant dense<0.000000e+00> : vector<1x32xf32>
      %153 = tpu.matmul %151, %152, %cst_51 {dimension_numbers = #tpu.dot_dimension_numbers<[1], [0], [0], [1], [0, 0, 1, 1], [], []>} : vector<1x64xbf16>, vector<64x32xbf16>, vector<1x32xf32> -> vector<1x32xf32>
      %154 = vector.shape_cast %153 : vector<1x32xf32> to vector<1x1x32xf32>
      %c0_52 = arith.constant 0 : index
      %c0_53 = arith.constant 0 : index
      %c0_54 = arith.constant 0 : index
      %155 = vector.load %arg12[%c0_52, %c0_53, %c0_54] : memref<1x1x32xf32, #tpu.memory_space<vmem>>, vector<1x1x32xf32>
      tpu.vector_store %arg12[%c0_52, %c0_53, %c0_54], %154 {strides = array<i32>} : memref<1x1x32xf32, #tpu.memory_space<vmem>>, vector<1x1x32xf32>,
    } else {
    }
    return
  }
  func.func @transform_0(%arg0: i32, %arg1: i32) -> (i32, i32, i32) {
    %c0_i32 = arith.constant 0 : i32
    %c0_i32_0 = arith.constant 0 : i32
    %c0_i32_1 = arith.constant 0 : i32
    return %arg0, %c0_i32, %c0_i32_0 : i32, i32, i32
  }
  func.func @transform_1(%arg0: i32, %arg1: i32) -> (i32, i32) {
    %c0_i32 = arith.constant 0 : i32
    %c0_i32_0 = arith.constant 0 : i32
    %c0_i32_1 = arith.constant 0 : i32
    return %c0_i32, %c0_i32_0 : i32, i32
  }
  func.func @transform_2(%arg0: i32, %arg1: i32) -> (i32, i32) {
    %c0_i32 = arith.constant 0 : i32
    %c0_i32_0 = arith.constant 0 : i32
    %c0_i32_1 = arith.constant 0 : i32
    return %c0_i32, %c0_i32_0 : i32, i32
  }
  func.func @transform_3(%arg0: i32, %arg1: i32) -> (i32, i32, i32) {
    %c0_i32 = arith.constant 0 : i32
    %c0_i32_0 = arith.constant 0 : i32
    %c0_i32_1 = arith.constant 0 : i32
    return %arg1, %c0_i32, %c0_i32_0 : i32, i32, i32
  }
  func.func @transform_4(%arg0: i32, %arg1: i32) -> (i32, i32, i32) {
    %c0_i32 = arith.constant 0 : i32
    %c0_i32_0 = arith.constant 0 : i32
    %c0_i32_1 = arith.constant 0 : i32
    return %arg1, %c0_i32, %c0_i32_0 : i32, i32, i32
  }
  func.func @transform_5(%arg0: i32, %arg1: i32) -> (i32, i32, i32) {
    %c0_i32 = arith.constant 0 : i32
    %c0_i32_0 = arith.constant 0 : i32
    %c0_i32_1 = arith.constant 0 : i32
    return %arg1, %c0_i32, %c0_i32_0 : i32, i32, i32
  }
  func.func @transform_6(%arg0: i32, %arg1: i32) -> (i32, i32, i32) {
    %c0_i32 = arith.constant 0 : i32
    %c0_i32_0 = arith.constant 0 : i32
    %c0_i32_1 = arith.constant 0 : i32
    return %arg1, %c0_i32, %c0_i32_0 : i32, i32, i32
  }
  func.func @transform_7(%arg0: i32, %arg1: i32) -> (i32, i32, i32) {
    %c0_i32 = arith.constant 0 : i32
    %c0_i32_0 = arith.constant 0 : i32
    %c0_i32_1 = arith.constant 0 : i32
    return %arg1, %c0_i32, %c0_i32_0 : i32, i32, i32
  }
  func.func @transform_8(%arg0: i32, %arg1: i32) -> (i32, i32) {
    %c0_i32 = arith.constant 0 : i32
    %c0_i32_0 = arith.constant 0 : i32
    %c0_i32_1 = arith.constant 0 : i32
    return %c0_i32, %c0_i32_0 : i32, i32
  }
  func.func @transform_9(%arg0: i32, %arg1: i32) -> (i32, i32) {
    %c0_i32 = arith.constant 0 : i32
    %c0_i32_0 = arith.constant 0 : i32
    %c0_i32_1 = arith.constant 0 : i32
    return %c0_i32, %c0_i32_0 : i32, i32
  }
  func.func @transform_10(%arg0: i32, %arg1: i32) -> (i32, i32, i32) {
    %c0_i32 = arith.constant 0 : i32
    %c0_i32_0 = arith.constant 0 : i32
    %c0_i32_1 = arith.constant 0 : i32
    return %arg0, %c0_i32, %c0_i32_0 : i32, i32, i32
  }
}

</mosaic_0001>

<llo_original>
// kernel: tpu_custom_call.1
$region0: #{tpu_custom_call.1}
  #allocation0 [shape = 'u32[]', space=smem, size = 0x4, offset = 0x4, fixed_abs, tag = 'smem constant byte address 0x4 - core index']
  #allocation1 [shape = 'u32[144,128]{1,0:T(1,128)}', space=vmem, size = 0x12000, scoped, tag = 'internal scratch']
  #allocation2 [shape = 'f32[8,64]{1,0:T(8,128)}', space=vmem, size = 0x1000, scoped, tag = 'scratch operand']
  %s0 = inlined_call_operand.vmem [shape: f32[2,4,192], index: 0, kind: input, shape index: {}]
  %s1 = inlined_call_operand.vmem [shape: bf16[192,64], index: 1, kind: input, shape index: {}]
  %s2 = inlined_call_operand.vmem [shape: f32[11,64], index: 2, kind: input, shape index: {}]
  %s3 = inlined_call_operand.vmem [shape: bf16[2,64,192], index: 3, kind: input, shape index: {}]
  %s4 = inlined_call_operand.vmem [shape: bf16[2,64,64], index: 4, kind: input, shape index: {}]
  %s5 = inlined_call_operand.vmem [shape: bf16[2,64,256], index: 5, kind: input, shape index: {}]
  %s6 = inlined_call_operand.vmem [shape: bf16[2,256,64], index: 6, kind: input, shape index: {}]
  %s7 = inlined_call_operand.vmem [shape: f32[2,8,256], index: 7, kind: input, shape index: {}]
  %s8 = inlined_call_operand.vmem [shape: f32[2,64], index: 8, kind: input, shape index: {}]
  %s9 = inlined_call_operand.vmem [shape: bf16[64,32], index: 9, kind: input, shape index: {}]
  %s10 = inlined_call_operand.hbm [shape: f32[2,1,32], index: 10, kind: output, shape index: {}]
  %s11 = sld [smem:[#allocation0]]
  $region81: #{tpu_custom_call.1} parent=0
    _
  %s13 = ssub.s32 1, %s11
  %s14 = scalar_select 0, %s13, %s11
  $region1: #{tpu_custom_call.1} parent=0
    #allocation3 [shape = 'u8[1024]{0}', space=vmem, size = 0x400, scoped, tag = 'output window, operand 0']
    #allocation4 [shape = 's32[2]{0}', space=sflag, size = 0x8, scoped, tag = 'scoped memory for tpu_custom_call.1']
    %15 = vsyncpa [#allocation4], 0
    %s16 = scalar_lea.sflag [#allocation4], 1
    %17 = vsyncpa %s16, 0
    loop: start=0, step=1, limit=6
    $region2: #{tpu_custom_call.1} parent=1 // loop_pre_header
      _
    $region3: #{tpu_custom_call.1} parent=1 // loop_header
      %s19 = sphi 0, %s23
      %p20 = scmp.ge.s32.totalorder %s19, 6
      %s26 = sphi 0, %s38
      %s27 = sphi 0, %s34
      %s28 = sphi 0, %s26
      %s29 = sphi 0, %s27
      %s30 = sphi 0, %s28
      %s31 = sphi 0, %s29
      %s41 = sphi 0, %s43
      %s44 = sphi 0, %s41
      %s45 = sphi 0, %s44
      %s61 = sphi 0, %s45
      %s65 = sphi 0, %s65
      %s67 = sphi 0, %s65
      %s68 = sphi 0, %s67
      %s82 = sphi 0, %s68
      %s86 = sphi 0, %s86
      %s88 = sphi 0, %s86
      %s89 = sphi 0, %s88
      %s103 = sphi 0, %s89
      %s109 = sphi 0, %s111
      %s112 = sphi 0, %s109
      %s113 = sphi 0, %s112
      %s129 = sphi 0, %s113
      %s135 = sphi 0, %s137
      %s138 = sphi 0, %s135
      %s139 = sphi 0, %s138
      %s155 = sphi 0, %s139
      %s161 = sphi 0, %s163
      %s164 = sphi 0, %s161
      %s165 = sphi 0, %s164
      %s181 = sphi 0, %s165
      %s187 = sphi 0, %s189
      %s190 = sphi 0, %s187
      %s191 = sphi 0, %s190
      %s207 = sphi 0, %s191
      %s213 = sphi 0, %s215
      %s216 = sphi 0, %s213
      %s217 = sphi 0, %s216
      %s233 = sphi 0, %s217
      %s237 = sphi 0, %s237
      %s239 = sphi 0, %s237
      %s240 = sphi 0, %s239
      %s254 = sphi 0, %s240
      %s258 = sphi 0, %s258
      %s260 = sphi 0, %s258
      %s261 = sphi 0, %s260
      %s275 = sphi 0, %s261
      %s281 = sphi 0, %s283
      %s284 = sphi 0, %s281
      %s285 = sphi 0, %s284
      %s301 = sphi 0, %s285
    $region4: #{tpu_custom_call.1} parent=1 // loop_header_branch
      %22 = sbr.rel (%p20) target = $region8
    $region5: #{tpu_custom_call.1} parent=1 // loop_body
      %s24 = ssub.s32 %s19, 1
      %s25 = ssub.s32 %s19, 2
      %s32 = sadd.s32 1, %s27
      %p33 = scmp.ge.s32.totalorder %s32, 2
      %s34 = scalar_select %p33, 0, %s32
      %s35 = sadd.s32 1, %s26
      %s36 = scalar_select %p33, %s35, %s26
      %p37 = scmp.ge.s32.totalorder %s36, 2
      %s38 = scalar_select %p37, 0, %s36
      %s39 = ssub.s32 %s26, %s38
      %p40 = scmp.eq.s32.totalorder %s39, 0
      %s42 = sadd.s32 %s41, 1
      %s43 = scalar_select %p40, %s41, %s42
      %p46 = pneg %p40
      %p47 = scmp.eq.s32.totalorder %s19, 3
      %p48 = por %p46, %p47
      %p49 = scmp.ne.s32.totalorder %s41, %s44
      %p50 = scmp.eq.s32.totalorder %s19, 0
      %p51 = por %p49, %p50
      %p52 = scmp.ne.s32.totalorder %s41, %s44
      %p53 = scmp.eq.s32.totalorder %s24, 3
      %p54 = por %p52, %p53
      %p55 = scmp.ne.s32.totalorder %s44, %s45
      %p56 = scmp.eq.s32.totalorder %s24, 0
      %p57 = por %p55, %p56
      %p58 = scmp.ne.s32.totalorder %s44, %s45
      %p59 = scmp.eq.s32.totalorder %s25, 3
      %p60 = por %p58, %p59
      %p62 = scmp.ne.s32.totalorder %s45, %s61
      %p63 = scmp.eq.s32.totalorder %s25, 0
      %p64 = por %p62, %p63
      %s66 = sadd.s32 %s65, 1
      %p69 = scmp.eq.s32.totalorder %s19, 3
      %p70 = scmp.ne.s32.totalorder %s65, %s67
      %p71 = scmp.eq.s32.totalorder %s19, 0
      %p72 = por %p70, %p71
      %p73 = scmp.ne.s32.totalorder %s65, %s67
      %p74 = scmp.eq.s32.totalorder %s24, 3
      %p75 = por %p73, %p74
      %p76 = scmp.ne.s32.totalorder %s67, %s68
      %p77 = scmp.eq.s32.totalorder %s24, 0
      %p78 = por %p76, %p77
      %p79 = scmp.ne.s32.totalorder %s67, %s68
      %p80 = scmp.eq.s32.totalorder %s25, 3
      %p81 = por %p79, %p80
      %p83 = scmp.ne.s32.totalorder %s68, %s82
      %p84 = scmp.eq.s32.totalorder %s25, 0
      %p85 = por %p83, %p84
      %s87 = sadd.s32 %s86, 1
      %p90 = scmp.eq.s32.totalorder %s19, 3
      %p91 = scmp.ne.s32.totalorder %s86, %s88
      %p92 = scmp.eq.s32.totalorder %s19, 0
      %p93 = por %p91, %p92
      %p94 = scmp.ne.s32.totalorder %s86, %s88
      %p95 = scmp.eq.s32.totalorder %s24, 3
      %p96 = por %p94, %p95
      %p97 = scmp.ne.s32.totalorder %s88, %s89
      %p98 = scmp.eq.s32.totalorder %s24, 0
      %p99 = por %p97, %p98
      %p100 = scmp.ne.s32.totalorder %s88, %s89
      %p101 = scmp.eq.s32.totalorder %s25, 3
      %p102 = por %p100, %p101
      %p104 = scmp.ne.s32.totalorder %s89, %s103
      %p105 = scmp.eq.s32.totalorder %s25, 0
      %p106 = por %p104, %p105
      %s107 = ssub.s32 %s27, %s34
      %p108 = scmp.eq.s32.totalorder %s107, 0
      %s110 = sadd.s32 %s109, 1
      %s111 = scalar_select %p108, %s109, %s110
      %p114 = pneg %p108
      %p115 = scmp.eq.s32.totalorder %s19, 3
      %p116 = por %p114, %p115
      %p117 = scmp.ne.s32.totalorder %s109, %s112
      %p118 = scmp.eq.s32.totalorder %s19, 0
      %p119 = por %p117, %p118
      %p120 = scmp.ne.s32.totalorder %s109, %s112
      %p121 = scmp.eq.s32.totalorder %s24, 3
      %p122 = por %p120, %p121
      %p123 = scmp.ne.s32.totalorder %s112, %s113
      %p124 = scmp.eq.s32.totalorder %s24, 0
      %p125 = por %p123, %p124
      %p126 = scmp.ne.s32.totalorder %s112, %s113
      %p127 = scmp.eq.s32.totalorder %s25, 3
      %p128 = por %p126, %p127
      %p130 = scmp.ne.s32.totalorder %s113, %s129
      %p131 = scmp.eq.s32.totalorder %s25, 0
      %p132 = por %p130, %p131
      %s133 = ssub.s32 %s27, %s34
      %p134 = scmp.eq.s32.totalorder %s133, 0
      %s136 = sadd.s32 %s135, 1
      %s137 = scalar_select %p134, %s135, %s136
      %p140 = pneg %p134
      %p141 = scmp.eq.s32.totalorder %s19, 3
      %p142 = por %p140, %p141
      %p143 = scmp.ne.s32.totalorder %s135, %s138
      %p144 = scmp.eq.s32.totalorder %s19, 0
      %p145 = por %p143, %p144
      %p146 = scmp.ne.s32.totalorder %s135, %s138
      %p147 = scmp.eq.s32.totalorder %s24, 3
      %p148 = por %p146, %p147
      %p149 = scmp.ne.s32.totalorder %s138, %s139
      %p150 = scmp.eq.s32.totalorder %s24, 0
      %p151 = por %p149, %p150
      %p152 = scmp.ne.s32.totalorder %s138, %s139
      %p153 = scmp.eq.s32.totalorder %s25, 3
      %p154 = por %p152, %p153
      %p156 = scmp.ne.s32.totalorder %s139, %s155
      %p157 = scmp.eq.s32.totalorder %s25, 0
      %p158 = por %p156, %p157
      %s159 = ssub.s32 %s27, %s34
      %p160 = scmp.eq.s32.totalorder %s159, 0
      %s162 = sadd.s32 %s161, 1
      %s163 = scalar_select %p160, %s161, %s162
      %p166 = pneg %p160
      %p167 = scmp.eq.s32.totalorder %s19, 3
      %p168 = por %p166, %p167
      %p169 = scmp.ne.s32.totalorder %s161, %s164
      %p170 = scmp.eq.s32.totalorder %s19, 0
      %p171 = por %p169, %p170
      %p172 = scmp.ne.s32.totalorder %s161, %s164
      %p173 = scmp.eq.s32.totalorder %s24, 3
      %p174 = por %p172, %p173
      %p175 = scmp.ne.s32.totalorder %s164, %s165
      %p176 = scmp.eq.s32.totalorder %s24, 0
      %p177 = por %p175, %p176
      %p178 = scmp.ne.s32.totalorder %s164, %s165
      %p179 = scmp.eq.s32.totalorder %s25, 3
      %p180 = por %p178, %p179
      %p182 = scmp.ne.s32.totalorder %s165, %s181
      %p183 = scmp.eq.s32.totalorder %s25, 0
      %p184 = por %p182, %p183
      %s185 = ssub.s32 %s27, %s34
      %p186 = scmp.eq.s32.totalorder %s185, 0
      %s188 = sadd.s32 %s187, 1
      %s189 = scalar_select %p186, %s187, %s188
      %p192 = pneg %p186
      %p193 = scmp.eq.s32.totalorder %s19, 3
      %p194 = por %p192, %p193
      %p195 = scmp.ne.s32.totalorder %s187, %s190
      %p196 = scmp.eq.s32.totalorder %s19, 0
      %p197 = por %p195, %p196
      %p198 = scmp.ne.s32.totalorder %s187, %s190
      %p199 = scmp.eq.s32.totalorder %s24, 3
      %p200 = por %p198, %p199
      %p201 = scmp.ne.s32.totalorder %s190, %s191
      %p202 = scmp.eq.s32.totalorder %s24, 0
      %p203 = por %p201, %p202
      %p204 = scmp.ne.s32.totalorder %s190, %s191
      %p205 = scmp.eq.s32.totalorder %s25, 3
      %p206 = por %p204, %p205
      %p208 = scmp.ne.s32.totalorder %s191, %s207
      %p209 = scmp.eq.s32.totalorder %s25, 0
      %p210 = por %p208, %p209
      %s211 = ssub.s32 %s27, %s34
      %p212 = scmp.eq.s32.totalorder %s211, 0
      %s214 = sadd.s32 %s213, 1
      %s215 = scalar_select %p212, %s213, %s214
      %p218 = pneg %p212
      %p219 = scmp.eq.s32.totalorder %s19, 3
      %p220 = por %p218, %p219
      %p221 = scmp.ne.s32.totalorder %s213, %s216
      %p222 = scmp.eq.s32.totalorder %s19, 0
      %p223 = por %p221, %p222
      %p224 = scmp.ne.s32.totalorder %s213, %s216
      %p225 = scmp.eq.s32.totalorder %s24, 3
      %p226 = por %p224, %p225
      %p227 = scmp.ne.s32.totalorder %s216, %s217
      %p228 = scmp.eq.s32.totalorder %s24, 0
      %p229 = por %p227, %p228
      %p230 = scmp.ne.s32.totalorder %s216, %s217
      %p231 = scmp.eq.s32.totalorder %s25, 3
      %p232 = por %p230, %p231
      %p234 = scmp.ne.s32.totalorder %s217, %s233
      %p235 = scmp.eq.s32.totalorder %s25, 0
      %p236 = por %p234, %p235
      %s238 = sadd.s32 %s237, 1
      %p241 = scmp.eq.s32.totalorder %s19, 3
      %p242 = scmp.ne.s32.totalorder %s237, %s239
      %p243 = scmp.eq.s32.totalorder %s19, 0
      %p244 = por %p242, %p243
      %p245 = scmp.ne.s32.totalorder %s237, %s239
      %p246 = scmp.eq.s32.totalorder %s24, 3
      %p247 = por %p245, %p246
      %p248 = scmp.ne.s32.totalorder %s239, %s240
      %p249 = scmp.eq.s32.totalorder %s24, 0
      %p250 = por %p248, %p249
      %p251 = scmp.ne.s32.totalorder %s239, %s240
      %p252 = scmp.eq.s32.totalorder %s25, 3
      %p253 = por %p251, %p252
      %p255 = scmp.ne.s32.totalorder %s240, %s254
      %p256 = scmp.eq.s32.totalorder %s25, 0
      %p257 = por %p255, %p256
      %s259 = sadd.s32 %s258, 1
      %p262 = scmp.eq.s32.totalorder %s19, 3
      %p263 = scmp.ne.s32.totalorder %s258, %s260
      %p264 = scmp.eq.s32.totalorder %s19, 0
      %p265 = por %p263, %p264
      %p266 = scmp.ne.s32.totalorder %s258, %s260
      %p267 = scmp.eq.s32.totalorder %s24, 3
      %p268 = por %p266, %p267
      %p269 = scmp.ne.s32.totalorder %s260, %s261
      %p270 = scmp.eq.s32.totalorder %s24, 0
      %p271 = por %p269, %p270
      %p272 = scmp.ne.s32.totalorder %s260, %s261
      %p273 = scmp.eq.s32.totalorder %s25, 3
      %p274 = por %p272, %p273
      %p276 = scmp.ne.s32.totalorder %s261, %s275
      %p277 = scmp.eq.s32.totalorder %s25, 0
      %p278 = por %p276, %p277
      %s279 = ssub.s32 %s26, %s38
      %p280 = scmp.eq.s32.totalorder %s279, 0
      %s282 = sadd.s32 %s281, 1
      %s283 = scalar_select %p280, %s281, %s282
      %p286 = pneg %p280
      %p287 = scmp.eq.s32.totalorder %s19, 3
      %p288 = por %p286, %p287
      %p289 = scmp.ne.s32.totalorder %s281, %s284
      %p290 = scmp.eq.s32.totalorder %s19, 0
      %p291 = por %p289, %p290
      %p292 = scmp.ne.s32.totalorder %s281, %s284
      %p293 = scmp.eq.s32.totalorder %s24, 3
      %p294 = por %p292, %p293
      %p295 = scmp.ne.s32.totalorder %s284, %s285
      %p296 = scmp.eq.s32.totalorder %s24, 0
      %p297 = por %p295, %p296
      %p298 = scmp.ne.s32.totalorder %s284, %s285
      %p299 = scmp.eq.s32.totalorder %s25, 3
      %p300 = por %p298, %p299
      %p302 = scmp.ne.s32.totalorder %s285, %s301
      %p303 = scmp.eq.s32.totalorder %s25, 0
      %p304 = por %p302, %p303
      %p305 = scmp.le.s32.totalorder 1, %s19
      %p306 = scmp.lt.s32.totalorder %s19, 5
      %p307 = pnand %p305, %p306
      %p308 = pneg %p307
      // Predicated region
      $region9: #{tpu_custom_call.1} parent=5 // pred_check
        _
      $region10: #{tpu_custom_call.1} parent=5 // pred_check_branch
        %310 = sbr.rel (%p307) target = $region12
      $region11: #{tpu_custom_call.1} parent=5 // pred_region
        %s311 = ssub.s32 %s19, 1
        // Predicated region
        $region13: #{tpu_custom_call.1} parent=11 // pred_check
          %p312 = pneg %p78
        $region14: #{tpu_custom_call.1} parent=11 // pred_check_branch
          %314 = sbr.rel (%p312) target = $region16
        $region15: #{tpu_custom_call.1} parent=11 // pred_region
          _
        $region16: #{tpu_custom_call.1} parent=11 // pred_fallthru
          _
        // Predicated region
        $region17: #{tpu_custom_call.1} parent=11 // pred_check
          %p315 = pneg %p99
        $region18: #{tpu_custom_call.1} parent=11 // pred_check_branch
          %317 = sbr.rel (%p315) target = $region20
        $region19: #{tpu_custom_call.1} parent=11 // pred_region
          _
        $region20: #{tpu_custom_call.1} parent=11 // pred_fallthru
          _
        // Predicated region
        $region21: #{tpu_custom_call.1} parent=11 // pred_check
          %p318 = pneg %p250
        $region22: #{tpu_custom_call.1} parent=11 // pred_check_branch
          %320 = sbr.rel (%p318) target = $region24
        $region23: #{tpu_custom_call.1} parent=11 // pred_region
          _
        $region24: #{tpu_custom_call.1} parent=11 // pred_fallthru
          _
        // Predicated region
        $region25: #{tpu_custom_call.1} parent=11 // pred_check
          %p321 = pneg %p271
        $region26: #{tpu_custom_call.1} parent=11 // pred_check_branch
          %323 = sbr.rel (%p321) target = $region28
        $region27: #{tpu_custom_call.1} parent=11 // pred_region
          _
        $region28: #{tpu_custom_call.1} parent=11 // pred_fallthru
          _
      $region12: #{tpu_custom_call.1} parent=5 // pred_fallthru
        _
      %p324 = scmp.lt.s32.totalorder %s19, 4
      // Predicated region
      $region29: #{tpu_custom_call.1} parent=5 // pred_check
        %p325 = pneg %p324
      $region30: #{tpu_custom_call.1} parent=5 // pred_check_branch
        %327 = sbr.rel (%p325) target = $region32
      $region31: #{tpu_custom_call.1} parent=5 // pred_region
        // Predicated region
        $region33: #{tpu_custom_call.1} parent=31 // pred_check
          %p328 = pneg %p51
        $region34: #{tpu_custom_call.1} parent=31 // pred_check_branch
          %330 = sbr.rel (%p328) target = $region36
        $region35: #{tpu_custom_call.1} parent=31 // pred_region
          %p331 = scmp.lt.s32.totalorder %s26, 1
          %s332 = scalar_select %p331, %s26, 1
          %s333 = smul.addr %s332, 2
          %s334 = smul.addr %s333, 4
          %s335 = scalar_lea.vmem %s0, %s334
        $region36: #{tpu_custom_call.1} parent=31 // pred_fallthru
          _
        // Predicated region
        $region37: #{tpu_custom_call.1} parent=31 // pred_check
          %p336 = pneg %p119
        $region38: #{tpu_custom_call.1} parent=31 // pred_check_branch
          %338 = sbr.rel (%p336) target = $region40
        $region39: #{tpu_custom_call.1} parent=31 // pred_region
          %p339 = scmp.lt.s32.totalorder %s27, 1
          %s340 = scalar_select %p339, %s27, 1
          %s341 = smul.addr %s340, 16
          %s342 = smul.addr %s341, 4
          %s343 = scalar_lea.vmem %s3, %s342
        $region40: #{tpu_custom_call.1} parent=31 // pred_fallthru
          _
        // Predicated region
        $region41: #{tpu_custom_call.1} parent=31 // pred_check
          %p344 = pneg %p145
        $region42: #{tpu_custom_call.1} parent=31 // pred_check_branch
          %346 = sbr.rel (%p344) target = $region44
        $region43: #{tpu_custom_call.1} parent=31 // pred_region
          %p347 = scmp.lt.s32.totalorder %s27, 1
          %s348 = scalar_select %p347, %s27, 1
          %s349 = smul.addr %s348, 8
          %s350 = smul.addr %s349, 4
          %s351 = scalar_lea.vmem %s4, %s350
        $region44: #{tpu_custom_call.1} parent=31 // pred_fallthru
          _
        // Predicated region
        $region45: #{tpu_custom_call.1} parent=31 // pred_check
          %p352 = pneg %p171
        $region46: #{tpu_custom_call.1} parent=31 // pred_check_branch
          %354 = sbr.rel (%p352) target = $region48
        $region47: #{tpu_custom_call.1} parent=31 // pred_region
          %p355 = scmp.lt.s32.totalorder %s27, 1
          %s356 = scalar_select %p355, %s27, 1
          %s357 = smul.addr %s356, 16
          %s358 = smul.addr %s357, 4
          %s359 = scalar_lea.vmem %s5, %s358
        $region48: #{tpu_custom_call.1} parent=31 // pred_fallthru
          _
        // Predicated region
        $region49: #{tpu_custom_call.1} parent=31 // pred_check
          %p360 = pneg %p197
        $region50: #{tpu_custom_call.1} parent=31 // pred_check_branch
          %362 = sbr.rel (%p360) target = $region52
        $region51: #{tpu_custom_call.1} parent=31 // pred_region
          %p363 = scmp.lt.s32.totalorder %s27, 1
          %s364 = scalar_select %p363, %s27, 1
          %s365 = smul.addr %s364, 32
          %s366 = smul.addr %s365, 4
          %s367 = scalar_lea.vmem %s6, %s366
        $region52: #{tpu_custom_call.1} parent=31 // pred_fallthru
          _
        // Predicated region
        $region53: #{tpu_custom_call.1} parent=31 // pred_check
          %p368 = pneg %p223
        $region54: #{tpu_custom_call.1} parent=31 // pred_check_branch
          %370 = sbr.rel (%p368) target = $region56
        $region55: #{tpu_custom_call.1} parent=31 // pred_region
          %p371 = scmp.lt.s32.totalorder %s27, 1
          %s372 = scalar_select %p371, %s27, 1
          %s373 = smul.addr %s372, 2
          %s374 = smul.addr %s373, 8
          %s375 = scalar_lea.vmem %s7, %s374
        $region56: #{tpu_custom_call.1} parent=31 // pred_fallthru
          _
      $region32: #{tpu_custom_call.1} parent=5 // pred_fallthru
        _
      %p376 = scmp.le.s32.totalorder 1, %s19
      %p377 = scmp.lt.s32.totalorder %s19, 5
      %p378 = pnand %p376, %p377
      %p379 = pneg %p378
      // Predicated region
      $region57: #{tpu_custom_call.1} parent=5 // pred_check
        _
      $region58: #{tpu_custom_call.1} parent=5 // pred_check_branch
        %381 = sbr.rel (%p378) target = $region60
      $region59: #{tpu_custom_call.1} parent=5 // pred_region
        %s382 = ssub.s32 %s19, 1
        %p383 = scmp.lt.s32.totalorder %s28, 1
        %s384 = scalar_select %p383, %s28, 1
        %s385 = smul.addr %s384, 2
        %s386 = smul.addr %s385, 4
        %s387 = scalar_lea.vmem %s0, %s386
        %p388 = pneg %p57
        %p389 = pneg %p54
        %p390 = pneg %p78
        %p391 = pneg %p75
        %p392 = pneg %p99
        %p393 = pneg %p96
        %p394 = scmp.lt.s32.totalorder %s29, 1
        %s395 = scalar_select %p394, %s29, 1
        %s396 = smul.addr %s395, 16
        %s397 = smul.addr %s396, 4
        %s398 = scalar_lea.vmem %s3, %s397
        %p399 = pneg %p125
        %p400 = pneg %p122
        %p401 = scmp.lt.s32.totalorder %s29, 1
        %s402 = scalar_select %p401, %s29, 1
        %s403 = smul.addr %s402, 8
        %s404 = smul.addr %s403, 4
        %s405 = scalar_lea.vmem %s4, %s404
        %p406 = pneg %p151
        %p407 = pneg %p148
        %p408 = scmp.lt.s32.totalorder %s29, 1
        %s409 = scalar_select %p408, %s29, 1
        %s410 = smul.addr %s409, 16
        %s411 = smul.addr %s410, 4
        %s412 = scalar_lea.vmem %s5, %s411
        %p413 = pneg %p177
        %p414 = pneg %p174
        %p415 = scmp.lt.s32.totalorder %s29, 1
        %s416 = scalar_select %p415, %s29, 1
        %s417 = smul.addr %s416, 32
        %s418 = smul.addr %s417, 4
        %s419 = scalar_lea.vmem %s6, %s418
        %p420 = pneg %p203
        %p421 = pneg %p200
        %p422 = scmp.lt.s32.totalorder %s29, 1
        %s423 = scalar_select %p422, %s29, 1
        %s424 = smul.addr %s423, 2
        %s425 = smul.addr %s424, 8
        %s426 = scalar_lea.vmem %s7, %s425
        %p427 = pneg %p229
        %p428 = pneg %p226
        %p429 = pneg %p250
        %p430 = pneg %p247
        %p431 = pneg %p271
        %p432 = pneg %p268
        %p433 = pneg %p297
        %p434 = pneg %p294
        %s435 = sand.u32 %s284, 1
        %s436 = scalar_lea.sflag [#allocation4], %s435
        %s437 = sand.u32 %s284, 1
        %s438 = scalar_lea.vmem [#allocation3], %s437
        %p439 = scmp.lt.s32.totalorder %s28, 1
        %s440 = scalar_select %p439, %s28, 1
        %s441 = smul.addr %s440, 2
        %s442 = smul.addr %s441, 4
        %s443 = scalar_lea.vmem %s0, %s442
        %p444 = scmp.lt.s32.totalorder %s29, 1
        %s445 = scalar_select %p444, %s29, 1
        %s446 = smul.addr %s445, 16
        %s447 = smul.addr %s446, 4
        %s448 = scalar_lea.vmem %s3, %s447
        %p449 = scmp.lt.s32.totalorder %s29, 1
        %s450 = scalar_select %p449, %s29, 1
        %s451 = smul.addr %s450, 8
        %s452 = smul.addr %s451, 4
        %s453 = scalar_lea.vmem %s4, %s452
        %p454 = scmp.lt.s32.totalorder %s29, 1
        %s455 = scalar_select %p454, %s29, 1
        %s456 = smul.addr %s455, 16
        %s457 = smul.addr %s456, 4
        %s458 = scalar_lea.vmem %s5, %s457
        %p459 = scmp.lt.s32.totalorder %s29, 1
        %s460 = scalar_select %p459, %s29, 1
        %s461 = smul.addr %s460, 32
        %s462 = smul.addr %s461, 4
        %s463 = scalar_lea.vmem %s6, %s462
        %p464 = scmp.lt.s32.totalorder %s29, 1
        %s465 = scalar_select %p464, %s29, 1
        %s466 = smul.addr %s465, 2
        %s467 = smul.addr %s466, 8
        %s468 = scalar_lea.vmem %s7, %s467
        %p470 = scmp.eq.s32.totalorder %s29, 0
        // Predicated region
        $region61: #{tpu_custom_call.1} parent=59 // pred_check
          %p471 = pneg %p470
        $region62: #{tpu_custom_call.1} parent=59 // pred_check_branch
          %473 = sbr.rel (%p471) target = $region64
        $region63: #{tpu_custom_call.1} parent=59 // pred_region
          %v474 = vld [vmem:[%s2] sm:$0xff]
          %v475 = vld [vmem:[%s2 + $0x8] sm:$0x7]
          %v476 = vld [vmem:[%s443] sm:$0xff]
          %v478 = vcombine.high %v476, %v476
          %v480 = vpack.c.bf16 %v476, %v476
          %v481 = vpack.c.bf16 %v478, %v478
          %v482 = vld [vmem:[%s1] sm:$0xf]
          %v483 = vld [vmem:[%s1 + $0x4] sm:$0xf]
          %v484 = vld [vmem:[%s1 + $0x8] sm:$0xf]
          %v485 = vld [vmem:[%s1 + $0xc] sm:$0xf]
          %v486 = vld [vmem:[%s1 + $0x10] sm:$0xf]
          %v487 = vld [vmem:[%s1 + $0x14] sm:$0xf]
          %v488 = vld [vmem:[%s1 + $0x18] sm:$0xf]
          %v489 = vld [vmem:[%s1 + $0x1c] sm:$0xf]
          %v490 = vld [vmem:[%s1 + $0x20] sm:$0xf]
          %v491 = vld [vmem:[%s1 + $0x24] sm:$0xf]
          %v492 = vld [vmem:[%s1 + $0x28] sm:$0xf]
          %v493 = vld [vmem:[%s1 + $0x2c] sm:$0xf]
          %v494 = vld [vmem:[%s1 + $0x30] sm:$0xf]
          %v495 = vld [vmem:[%s1 + $0x34] sm:$0xf]
          %v496 = vld [vmem:[%s1 + $0x38] sm:$0xf]
          %v497 = vld [vmem:[%s1 + $0x3c] sm:$0xf]
          %v498 = vld [vmem:[%s1 + $0x40] sm:$0xf]
          %v499 = vld [vmem:[%s1 + $0x44] sm:$0xf]
          %v500 = vld [vmem:[%s1 + $0x48] sm:$0xf]
          %v501 = vld [vmem:[%s1 + $0x4c] sm:$0xf]
          %v502 = vld [vmem:[%s1 + $0x50] sm:$0xf]
          %v503 = vld [vmem:[%s1 + $0x54] sm:$0xf]
          %v504 = vld [vmem:[%s1 + $0x58] sm:$0xf]
          %v505 = vld [vmem:[%s1 + $0x5c] sm:$0xf]
          %v530 = vunpack.c.l.b16 %v482
          %v531 = vunpack.c.l.b16 %v483
          %v532 = vunpack.c.l.b16 %v484
          %v533 = vunpack.c.l.b16 %v485
          %v534 = vunpack.c.l.b16 %v486
          %v535 = vunpack.c.l.b16 %v487
          %v536 = vunpack.c.l.b16 %v488
          %v537 = vunpack.c.l.b16 %v489
          %v538 = vunpack.c.l.b16 %v490
          %v539 = vunpack.c.l.b16 %v491
          %v540 = vunpack.c.l.b16 %v492
          %v541 = vunpack.c.l.b16 %v493
          %v542 = vunpack.c.l.b16 %v494
          %v543 = vunpack.c.l.b16 %v495
          %v544 = vunpack.c.l.b16 %v496
          %v545 = vunpack.c.l.b16 %v497
          %v546 = vunpack.c.l.b16 %v498
          %v547 = vunpack.c.l.b16 %v499
          %v548 = vunpack.c.l.b16 %v500
          %v549 = vunpack.c.l.b16 %v501
          %v550 = vunpack.c.l.b16 %v502
          %v551 = vunpack.c.l.b16 %v503
          %v552 = vunpack.c.l.b16 %v504
          %v553 = vunpack.c.l.b16 %v505
          %v554 = vpack.c.b16 %v531, %v530
          %v555 = vpack.c.b16 %v533, %v532
          %v556 = vpack.c.b16 %v535, %v534
          %v557 = vpack.c.b16 %v537, %v536
          %v558 = vpack.c.b16 %v539, %v538
          %v559 = vpack.c.b16 %v541, %v540
          %v560 = vpack.c.b16 %v543, %v542
          %v561 = vpack.c.b16 %v545, %v544
          %v562 = vpack.c.b16 %v547, %v546
          %v563 = vpack.c.b16 %v549, %v548
          %v564 = vpack.c.b16 %v551, %v550
          %v565 = vpack.c.b16 %v553, %v552
          %vm578 = vcmask 523264
          %v580 = vsel %vm578, %v481, 0
          %582 = vmatprep.subr.bf16.mxu0 0
          %583 = vmatpush1.bf16.msra.mxu0 %v561
          %584 = vmatprep.subr.bf16.mxu0 0
          %585 = vmatpush1.bf16.msra.mxu0 %v560
          %586 = vmatprep.subr.bf16.mxu0 0
          %587 = vmatpush1.bf16.msra.mxu0 %v559
          %588 = vmatprep.subr.bf16.mxu0 0
          %589 = vmatpush1.bf16.msra.mxu0 %v558
          %590 = vmatprep.subr.bf16.mxu0 0
          %591 = vmatpush1.bf16.msra.mxu0 %v557
          %592 = vmatprep.subr.bf16.mxu0 0
          %593 = vmatpush1.bf16.msra.mxu0 %v556
          %594 = vmatprep.subr.bf16.mxu0 0
          %595 = vmatpush1.bf16.msra.mxu0 %v555
          %596 = vmatprep.subr.bf16.mxu0 0
          %597 = vmatpush1.bf16.msra.mxu0 %v554
          %598 = vmatprep.subr.bf16.mxu0 0
          %599 = vmatpush2.bf16.msra.mxu0 0
          %600 = vmatprep.subr.bf16.mxu0 0
          %601 = vmatpush2.bf16.msra.mxu0 0
          %602 = vmatprep.subr.bf16.mxu0 0
          %603 = vmatpush2.bf16.msra.mxu0 0
          %604 = vmatprep.subr.bf16.mxu0 0
          %605 = vmatpush2.bf16.msra.mxu0 0
          %606 = vmatprep.subr.bf16.mxu0 0
          %607 = vmatpush2.bf16.msra.mxu0 %v565
          %608 = vmatprep.subr.bf16.mxu0 0
          %609 = vmatpush2.bf16.msra.mxu0 %v564
          %610 = vmatprep.subr.bf16.mxu0 0
          %611 = vmatpush2.bf16.msra.mxu0 %v563
          %612 = vmatprep.subr.bf16.mxu0 0
          %613 = vmatpush2.bf16.msra.mxu0 %v562
          %614 = vmatprep.mubr.bf16.mxu0 %v580
          %615 = vmatmul.mubr.bf16.gmra.mxu0 %v480
          %v616 = vpop.f32.mrf.mxu0
          %v617 = vadd.f32 0.0, %v616
          %v618 = vpop.f32.mrf.mxu0
          %v619 = vpop.f32.mrf.mxu0
          %v620 = vpop.f32.mrf.mxu0
          %621 = vdwg.mxu0
          %vm622 = vcmask 516096
          %623 = vst.msk [vmem:[#allocation2] sm:$0x1] %vm622, %v475
          %vm624 = vcmask 519168
          %625 = vst.msk [vmem:[#allocation2 + $0x1] sm:$0xf] %vm624, %v617
          %vm626 = vcmask 518144
          %627 = vst.msk [vmem:[#allocation2 + $0x5] sm:$0x7] %vm626, 0.0
          %v628 = vld [vmem:[#allocation2] sm:$0xff]
          %v629 = vadd.f32 %v628, %v474
          %v630 = vsel %vm578, %v629, 0.0
          %631 = vadd.xlane.f32.xlu0 %v630
          %v632 = vpop.xlane.xlu0 %631
          %v633 = vrcp.pop 64.0
          %v634 = vmul.f32 %v632, %v633
          %v635 = vsub.f32 %v629, %v634
          %v636 = vmul.f32 %v635, %v635
          %v637 = vsel %vm578, %v636, 0.0
          %638 = vadd.xlane.f32.xlu0 %v637
          %v639 = vpop.xlane.xlu0 %638
          %v640 = vmul.f32 %v639, %v633
          %v641 = vadd.f32 %v640, 1e-05
          %v642 = vrsqrt.pop %v641
          %v643 = vmul.f32 %v635, %v642
          %v644 = vlaneseq
          %v645 = vshrl.u32 %v644, 7
          %v646 = vsub.s32 1, %v645
          %v647 = vrot.slane %v475, %v646
          %v648 = vmul.f32 %v643, %v647
          %v649 = vlaneseq
          %v650 = vshrl.u32 %v649, 7
          %v651 = vsub.s32 2, %v650
          %v652 = vrot.slane %v475, %v651
          %v653 = vadd.f32 %v648, %v652
          %654 = vst.msk [vmem:[#allocation2] sm:$0xff] %vm578, %v653
        $region64: #{tpu_custom_call.1} parent=59 // pred_fallthru
          _
        %v655 = vld [vmem:[%s468] sm:$0xff]
        %v656 = vld [vmem:[%s468 + $0x8] sm:$0xff]
        %v657 = vld [vmem:[#allocation2] sm:$0xff]
        %vm658 = vcmask 523264
        %v659 = vsel %vm658, %v657, 0.0
        %660 = vadd.xlane.f32.xlu0 %v659
        %v661 = vpop.xlane.xlu0 %660
        %v662 = vrcp.pop 64.0
        %v663 = vmul.f32 %v661, %v662
        %v664 = vsub.f32 %v657, %v663
        %v665 = vmul.f32 %v664, %v664
        %v666 = vsel %vm658, %v665, 0.0
        %667 = vadd.xlane.f32.xlu0 %v666
        %v668 = vpop.xlane.xlu0 %667
        %v669 = vmul.f32 %v668, %v662
        %v670 = vadd.f32 %v669, 1e-05
        %v671 = vrsqrt.pop %v670
        %v672 = vmul.f32 %v664, %v671
        %v673 = vlaneseq
        %v674 = vshrl.u32 %v673, 7
        %v675 = vsub.s32 0, %v674
        %v676 = vrot.slane %v655, %v675
        %v677 = vmul.f32 %v672, %v676
        %v678 = vlaneseq
        %v679 = vshrl.u32 %v678, 7
        %v680 = vsub.s32 1, %v679
        %v681 = vrot.slane %v655, %v680
        %v682 = vadd.f32 %v677, %v681
        %v683 = vpack.c.bf16 %v682, %v682
        %v684 = vld [vmem:[%s448] sm:$0xff]
        %v685 = vld [vmem:[%s448 + $0x8] sm:$0xff]
        %v686 = vld [vmem:[%s448 + $0x10] sm:$0xff]
        %v687 = vld [vmem:[%s448 + $0x18] sm:$0xff]
        %v688 = vld [vmem:[%s448 + $0x20] sm:$0xff]
        %v689 = vld [vmem:[%s448 + $0x28] sm:$0xff]
        %v690 = vld [vmem:[%s448 + $0x30] sm:$0xff]
        %v691 = vld [vmem:[%s448 + $0x38] sm:$0xff]
        %v692 = vlaneseq
        %v693 = vshrl.u32 %v692, 7
        %v694 = vsub.s32 6, %v693
        %v695 = vrot.slane %v655, %v694
        %v696 = vlaneseq
        %v697 = vshrl.u32 %v696, 7
        %v698 = vsub.s32 6, %v697
        %v699 = vrot.slane %v656, %v698
        %v708 = vunpack.c.l.b16 %v684
        %v709 = vunpack.c.h.b16 %v684
        %v710 = vunpack.c.l.b16 %v685
        %v711 = vunpack.c.h.b16 %v685
        %v712 = vunpack.c.l.b16 %v686
        %v713 = vunpack.c.h.b16 %v686
        %v714 = vunpack.c.l.b16 %v687
        %v715 = vunpack.c.h.b16 %v687
        %v716 = vunpack.c.l.b16 %v688
        %v717 = vunpack.c.h.b16 %v688
        %v718 = vunpack.c.l.b16 %v689
        %v719 = vunpack.c.h.b16 %v689
        %v720 = vunpack.c.l.b16 %v690
        %v721 = vunpack.c.h.b16 %v690
        %v722 = vunpack.c.l.b16 %v691
        %v723 = vunpack.c.h.b16 %v691
        %v724 = vpack.c.b16 %v710, %v708
        %v725 = vpack.c.b16 %v711, %v709
        %v726 = vpack.c.b16 %v714, %v712
        %v727 = vpack.c.b16 %v715, %v713
        %v728 = vpack.c.b16 %v718, %v716
        %v729 = vpack.c.b16 %v719, %v717
        %v730 = vpack.c.b16 %v722, %v720
        %v731 = vpack.c.b16 %v723, %v721
        %v741 = vsel %vm658, %v683, 0
        %743 = vmatprep.subr.bf16.mxu0 0
        %744 = vmatpush1.bf16.msra.mxu0 0
        %745 = vmatprep.subr.bf16.mxu0 0
        %746 = vmatpush1.bf16.msra.mxu0 0
        %747 = vmatprep.subr.bf16.mxu0 0
        %748 = vmatpush1.bf16.msra.mxu0 0
        %749 = vmatprep.subr.bf16.mxu0 0
        %750 = vmatpush1.bf16.msra.mxu0 0
        %751 = vmatprep.subr.bf16.mxu0 %v731
        %752 = vmatpush1.bf16.msra.mxu0 %v730
        %753 = vmatprep.subr.bf16.mxu0 %v729
        %754 = vmatpush1.bf16.msra.mxu0 %v728
        %755 = vmatprep.subr.bf16.mxu0 %v727
        %756 = vmatpush1.bf16.msra.mxu0 %v726
        %757 = vmatprep.subr.bf16.mxu0 %v725
        %758 = vmatpush1.bf16.msra.mxu0 %v724
        %759 = vmatprep.subr.bf16.mxu0 0
        %760 = vmatpush2.bf16.msra.mxu0 0
        %761 = vmatprep.subr.bf16.mxu0 0
        %762 = vmatpush2.bf16.msra.mxu0 0
        %763 = vmatprep.subr.bf16.mxu0 0
        %764 = vmatpush2.bf16.msra.mxu0 0
        %765 = vmatprep.subr.bf16.mxu0 0
        %766 = vmatpush2.bf16.msra.mxu0 0
        %767 = vmatprep.subr.bf16.mxu0 0
        %768 = vmatpush2.bf16.msra.mxu0 0
        %769 = vmatprep.subr.bf16.mxu0 0
        %770 = vmatpush2.bf16.msra.mxu0 0
        %771 = vmatprep.subr.bf16.mxu0 0
        %772 = vmatpush2.bf16.msra.mxu0 0
        %773 = vmatprep.subr.bf16.mxu0 0
        %774 = vmatpush2.bf16.msra.mxu0 0
        %775 = vmatprep.mubr.bf16.mxu0 0
        %776 = vmatmul.mubr.bf16.gmra.mxu0 %v741
        %v777 = vpop.f32.mrf.mxu0
        %v778 = vadd.f32 %v695, %v777
        %v779 = vpop.f32.mrf.mxu0
        %v780 = vadd.f32 %v699, %v779
        %v781 = vpop.f32.mrf.mxu0
        %v782 = vpop.f32.mrf.mxu0
        %783 = vdwg.mxu0
        %785 = vrot.lane.b32.xlu0 %v778, 112
        %v786 = vpop.permute.xlu0 %785
        %788 = vrot.lane.b32.xlu0 %v778, 96
        %v789 = vpop.permute.xlu0 %788
        %791 = vrot.lane.b32.xlu0 %v778, 80
        %v792 = vpop.permute.xlu0 %791
        %v794 = vcombine.low %v778, %v789
        %v795 = vcombine.high %v778, %v789
        %v797 = vunpack.c.l.s4 1983009808
        %v798 = vunpack.c.0.s8 %v797
        %v799 = vlaneseq
        %v800 = vshrl.u32 %v799, 7
        %v801 = vsub.s32 %v798, %v800
        %v802 = vrot.slane %v794, %v801
        %v804 = vunpack.c.l.s4 1983009808
        %v805 = vunpack.c.0.s8 %v804
        %v806 = vlaneseq
        %v807 = vshrl.u32 %v806, 7
        %v808 = vsub.s32 %v805, %v807
        %v809 = vrot.slane %v795, %v808
        %v810 = vcombine.low %v786, %v792
        %v811 = vcombine.high %v786, %v792
        %v813 = vunpack.c.l.s4 1983009808
        %v814 = vunpack.c.0.s8 %v813
        %v815 = vlaneseq
        %v816 = vshrl.u32 %v815, 7
        %v817 = vsub.s32 %v814, %v816
        %v818 = vrot.slane %v810, %v817
        %v820 = vunpack.c.l.s4 1983009808
        %v821 = vunpack.c.0.s8 %v820
        %v822 = vlaneseq
        %v823 = vshrl.u32 %v822, 7
        %v824 = vsub.s32 %v821, %v823
        %v825 = vrot.slane %v811, %v824
        %v826 = vcombine.low %v802, %v818
        %v827 = vcombine.high %v802, %v818
        %v829 = vunpack.c.l.s4 1934713408
        %v830 = vunpack.c.0.s8 %v829
        %v831 = vlaneseq
        %v832 = vshrl.u32 %v831, 7
        %v833 = vsub.s32 %v830, %v832
        %v834 = vrot.slane %v826, %v833
        %v836 = vunpack.c.l.s4 1934713408
        %v837 = vunpack.c.0.s8 %v836
        %v838 = vlaneseq
        %v839 = vshrl.u32 %v838, 7
        %v840 = vsub.s32 %v837, %v839
        %v841 = vrot.slane %v827, %v840
        %v842 = vcombine.low %v809, %v825
        %v843 = vcombine.high %v809, %v825
        %v845 = vunpack.c.l.s4 1934713408
        %v846 = vunpack.c.0.s8 %v845
        %v847 = vlaneseq
        %v848 = vshrl.u32 %v847, 7
        %v849 = vsub.s32 %v846, %v848
        %v850 = vrot.slane %v842, %v849
        %v852 = vunpack.c.l.s4 1934713408
        %v853 = vunpack.c.0.s8 %v852
        %v854 = vlaneseq
        %v855 = vshrl.u32 %v854, 7
        %v856 = vsub.s32 %v853, %v855
        %v857 = vrot.slane %v843, %v856
        %v858 = vcombine.high %v834, 0.0
        %v859 = vcombine.high %v841, 0.0
        %v860 = vcombine.high %v850, 0.0
        %v861 = vcombine.high %v857, 0.0
        %v862 = vcombine.low %v834, %v841
        %v864 = vunpack.c.l.s4 1983009808
        %v865 = vunpack.c.0.s8 %v864
        %v866 = vlaneseq
        %v867 = vshrl.u32 %v866, 7
        %v868 = vsub.s32 %v865, %v867
        %v869 = vrot.slane %v862, %v868
        %v870 = vcombine.low %v858, %v859
        %v872 = vunpack.c.l.s4 1983009808
        %v873 = vunpack.c.0.s8 %v872
        %v874 = vlaneseq
        %v875 = vshrl.u32 %v874, 7
        %v876 = vsub.s32 %v873, %v875
        %v877 = vrot.slane %v870, %v876
        %v878 = vcombine.low %v850, %v857
        %v880 = vunpack.c.l.s4 1983009808
        %v881 = vunpack.c.0.s8 %v880
        %v882 = vlaneseq
        %v883 = vshrl.u32 %v882, 7
        %v884 = vsub.s32 %v881, %v883
        %v885 = vrot.slane %v878, %v884
        %v886 = vcombine.low %v860, %v861
        %v888 = vunpack.c.l.s4 1983009808
        %v889 = vunpack.c.0.s8 %v888
        %v890 = vlaneseq
        %v891 = vshrl.u32 %v890, 7
        %v892 = vsub.s32 %v889, %v891
        %v893 = vrot.slane %v886, %v892
        %v894 = vcombine.low %v869, %v877
        %v895 = vcombine.high %v869, %v877
        %v897 = vunpack.c.l.s4 1934713408
        %v898 = vunpack.c.0.s8 %v897
        %v899 = vlaneseq
        %v900 = vshrl.u32 %v899, 7
        %v901 = vsub.s32 %v898, %v900
        %v902 = vrot.slane %v894, %v901
        %v904 = vunpack.c.l.s4 1934713408
        %v905 = vunpack.c.0.s8 %v904
        %v906 = vlaneseq
        %v907 = vshrl.u32 %v906, 7
        %v908 = vsub.s32 %v905, %v907
        %v909 = vrot.slane %v895, %v908
        %v910 = vcombine.low %v885, %v893
        %v911 = vcombine.high %v885, %v893
        %v913 = vunpack.c.l.s4 1934713408
        %v914 = vunpack.c.0.s8 %v913
        %v915 = vlaneseq
        %v916 = vshrl.u32 %v915, 7
        %v917 = vsub.s32 %v914, %v916
        %v918 = vrot.slane %v910, %v917
        %v920 = vunpack.c.l.s4 1934713408
        %v921 = vunpack.c.0.s8 %v920
        %v922 = vlaneseq
        %v923 = vshrl.u32 %v922, 7
        %v924 = vsub.s32 %v921, %v923
        %v925 = vrot.slane %v911, %v924
        %v926 = vcombine.low %v902, %v918
        %v927 = vcombine.high %v902, %v918
        %v928 = vcombine.low %v909, %v925
        %v929 = vcombine.high %v909, %v925
        %930 = vrot.lane.b32.xlu0 %v778, 64
        %v931 = vpop.permute.xlu0 %930
        %932 = vrot.lane.b32.xlu0 %v786, 64
        %v933 = vpop.permute.xlu0 %932
        %934 = vrot.lane.b32.xlu0 %v789, 64
        %v935 = vpop.permute.xlu0 %934
        %936 = vrot.lane.b32.xlu0 %v792, 64
        %v937 = vpop.permute.xlu0 %936
        %v942 = vcombine.low %v931, %v935
        %v943 = vcombine.high %v931, %v935
        %v945 = vunpack.c.l.s4 1983009808
        %v946 = vunpack.c.0.s8 %v945
        %v947 = vlaneseq
        %v948 = vshrl.u32 %v947, 7
        %v949 = vsub.s32 %v946, %v948
        %v950 = vrot.slane %v942, %v949
        %v952 = vunpack.c.l.s4 1983009808
        %v953 = vunpack.c.0.s8 %v952
        %v954 = vlaneseq
        %v955 = vshrl.u32 %v954, 7
        %v956 = vsub.s32 %v953, %v955
        %v957 = vrot.slane %v943, %v956
        %v958 = vcombine.low %v933, %v937
        %v959 = vcombine.high %v933, %v937
        %v961 = vunpack.c.l.s4 1983009808
        %v962 = vunpack.c.0.s8 %v961
        %v963 = vlaneseq
        %v964 = vshrl.u32 %v963, 7
        %v965 = vsub.s32 %v962, %v964
        %v966 = vrot.slane %v958, %v965
        %v968 = vunpack.c.l.s4 1983009808
        %v969 = vunpack.c.0.s8 %v968
        %v970 = vlaneseq
        %v971 = vshrl.u32 %v970, 7
        %v972 = vsub.s32 %v969, %v971
        %v973 = vrot.slane %v959, %v972
        %v974 = vcombine.low %v950, %v966
        %v975 = vcombine.high %v950, %v966
        %v977 = vunpack.c.l.s4 1934713408
        %v978 = vunpack.c.0.s8 %v977
        %v979 = vlaneseq
        %v980 = vshrl.u32 %v979, 7
        %v981 = vsub.s32 %v978, %v980
        %v982 = vrot.slane %v974, %v981
        %v984 = vunpack.c.l.s4 1934713408
        %v985 = vunpack.c.0.s8 %v984
        %v986 = vlaneseq
        %v987 = vshrl.u32 %v986, 7
        %v988 = vsub.s32 %v985, %v987
        %v989 = vrot.slane %v975, %v988
        %v990 = vcombine.low %v957, %v973
        %v991 = vcombine.high %v957, %v973
        %v993 = vunpack.c.l.s4 1934713408
        %v994 = vunpack.c.0.s8 %v993
        %v995 = vlaneseq
        %v996 = vshrl.u32 %v995, 7
        %v997 = vsub.s32 %v994, %v996
        %v998 = vrot.slane %v990, %v997
        %v1000 = vunpack.c.l.s4 1934713408
        %v1001 = vunpack.c.0.s8 %v1000
        %v1002 = vlaneseq
        %v1003 = vshrl.u32 %v1002, 7
        %v1004 = vsub.s32 %v1001, %v1003
        %v1005 = vrot.slane %v991, %v1004
        %v1006 = vcombine.high %v982, 0.0
        %v1007 = vcombine.high %v989, 0.0
        %v1008 = vcombine.high %v998, 0.0
        %v1009 = vcombine.high %v1005, 0.0
        %v1010 = vcombine.low %v982, %v989
        %v1012 = vunpack.c.l.s4 1983009808
        %v1013 = vunpack.c.0.s8 %v1012
        %v1014 = vlaneseq
        %v1015 = vshrl.u32 %v1014, 7
        %v1016 = vsub.s32 %v1013, %v1015
        %v1017 = vrot.slane %v1010, %v1016
        %v1018 = vcombine.low %v1006, %v1007
        %v1020 = vunpack.c.l.s4 1983009808
        %v1021 = vunpack.c.0.s8 %v1020
        %v1022 = vlaneseq
        %v1023 = vshrl.u32 %v1022, 7
        %v1024 = vsub.s32 %v1021, %v1023
        %v1025 = vrot.slane %v1018, %v1024
        %v1026 = vcombine.low %v998, %v1005
        %v1028 = vunpack.c.l.s4 1983009808
        %v1029 = vunpack.c.0.s8 %v1028
        %v1030 = vlaneseq
        %v1031 = vshrl.u32 %v1030, 7
        %v1032 = vsub.s32 %v1029, %v1031
        %v1033 = vrot.slane %v1026, %v1032
        %v1034 = vcombine.low %v1008, %v1009
        %v1036 = vunpack.c.l.s4 1983009808
        %v1037 = vunpack.c.0.s8 %v1036
        %v1038 = vlaneseq
        %v1039 = vshrl.u32 %v1038, 7
        %v1040 = vsub.s32 %v1037, %v1039
        %v1041 = vrot.slane %v1034, %v1040
        %v1042 = vcombine.low %v1017, %v1025
        %v1043 = vcombine.high %v1017, %v1025
        %v1045 = vunpack.c.l.s4 1934713408
        %v1046 = vunpack.c.0.s8 %v1045
        %v1047 = vlaneseq
        %v1048 = vshrl.u32 %v1047, 7
        %v1049 = vsub.s32 %v1046, %v1048
        %v1050 = vrot.slane %v1042, %v1049
        %v1052 = vunpack.c.l.s4 1934713408
        %v1053 = vunpack.c.0.s8 %v1052
        %v1054 = vlaneseq
        %v1055 = vshrl.u32 %v1054, 7
        %v1056 = vsub.s32 %v1053, %v1055
        %v1057 = vrot.slane %v1043, %v1056
        %v1058 = vcombine.low %v1033, %v1041
        %v1059 = vcombine.high %v1033, %v1041
        %v1061 = vunpack.c.l.s4 1934713408
        %v1062 = vunpack.c.0.s8 %v1061
        %v1063 = vlaneseq
        %v1064 = vshrl.u32 %v1063, 7
        %v1065 = vsub.s32 %v1062, %v1064
        %v1066 = vrot.slane %v1058, %v1065
        %v1068 = vunpack.c.l.s4 1934713408
        %v1069 = vunpack.c.0.s8 %v1068
        %v1070 = vlaneseq
        %v1071 = vshrl.u32 %v1070, 7
        %v1072 = vsub.s32 %v1069, %v1071
        %v1073 = vrot.slane %v1059, %v1072
        %v1074 = vcombine.low %v1050, %v1066
        %v1075 = vcombine.high %v1050, %v1066
        %v1076 = vcombine.low %v1057, %v1073
        %v1077 = vcombine.high %v1057, %v1073
        %1079 = vrot.lane.b32.xlu0 %v780, 112
        %v1080 = vpop.permute.xlu0 %1079
        %1082 = vrot.lane.b32.xlu0 %v780, 96
        %v1083 = vpop.permute.xlu0 %1082
        %1085 = vrot.lane.b32.xlu0 %v780, 80
        %v1086 = vpop.permute.xlu0 %1085
        %v1088 = vcombine.low %v780, %v1083
        %v1089 = vcombine.high %v780, %v1083
        %v1091 = vunpack.c.l.s4 1983009808
        %v1092 = vunpack.c.0.s8 %v1091
        %v1093 = vlaneseq
        %v1094 = vshrl.u32 %v1093, 7
        %v1095 = vsub.s32 %v1092, %v1094
        %v1096 = vrot.slane %v1088, %v1095
        %v1098 = vunpack.c.l.s4 1983009808
        %v1099 = vunpack.c.0.s8 %v1098
        %v1100 = vlaneseq
        %v1101 = vshrl.u32 %v1100, 7
        %v1102 = vsub.s32 %v1099, %v1101
        %v1103 = vrot.slane %v1089, %v1102
        %v1104 = vcombine.low %v1080, %v1086
        %v1105 = vcombine.high %v1080, %v1086
        %v1107 = vunpack.c.l.s4 1983009808
        %v1108 = vunpack.c.0.s8 %v1107
        %v1109 = vlaneseq
        %v1110 = vshrl.u32 %v1109, 7
        %v1111 = vsub.s32 %v1108, %v1110
        %v1112 = vrot.slane %v1104, %v1111
        %v1114 = vunpack.c.l.s4 1983009808
        %v1115 = vunpack.c.0.s8 %v1114
        %v1116 = vlaneseq
        %v1117 = vshrl.u32 %v1116, 7
        %v1118 = vsub.s32 %v1115, %v1117
        %v1119 = vrot.slane %v1105, %v1118
        %v1120 = vcombine.low %v1096, %v1112
        %v1121 = vcombine.high %v1096, %v1112
        %v1123 = vunpack.c.l.s4 1934713408
        %v1124 = vunpack.c.0.s8 %v1123
        %v1125 = vlaneseq
        %v1126 = vshrl.u32 %v1125, 7
        %v1127 = vsub.s32 %v1124, %v1126
        %v1128 = vrot.slane %v1120, %v1127
        %v1130 = vunpack.c.l.s4 1934713408
        %v1131 = vunpack.c.0.s8 %v1130
        %v1132 = vlaneseq
        %v1133 = vshrl.u32 %v1132, 7
        %v1134 = vsub.s32 %v1131, %v1133
        %v1135 = vrot.slane %v1121, %v1134
        %v1136 = vcombine.low %v1103, %v1119
        %v1137 = vcombine.high %v1103, %v1119
        %v1139 = vunpack.c.l.s4 1934713408
        %v1140 = vunpack.c.0.s8 %v1139
        %v1141 = vlaneseq
        %v1142 = vshrl.u32 %v1141, 7
        %v1143 = vsub.s32 %v1140, %v1142
        %v1144 = vrot.slane %v1136, %v1143
        %v1146 = vunpack.c.l.s4 1934713408
        %v1147 = vunpack.c.0.s8 %v1146
        %v1148 = vlaneseq
        %v1149 = vshrl.u32 %v1148, 7
        %v1150 = vsub.s32 %v1147, %v1149
        %v1151 = vrot.slane %v1137, %v1150
        %v1152 = vcombine.high %v1128, 0.0
        %v1153 = vcombine.high %v1135, 0.0
        %v1154 = vcombine.high %v1144, 0.0
        %v1155 = vcombine.high %v1151, 0.0
        %v1156 = vcombine.low %v1128, %v1135
        %v1158 = vunpack.c.l.s4 1983009808
        %v1159 = vunpack.c.0.s8 %v1158
        %v1160 = vlaneseq
        %v1161 = vshrl.u32 %v1160, 7
        %v1162 = vsub.s32 %v1159, %v1161
        %v1163 = vrot.slane %v1156, %v1162
        %v1164 = vcombine.low %v1152, %v1153
        %v1166 = vunpack.c.l.s4 1983009808
        %v1167 = vunpack.c.0.s8 %v1166
        %v1168 = vlaneseq
        %v1169 = vshrl.u32 %v1168, 7
        %v1170 = vsub.s32 %v1167, %v1169
        %v1171 = vrot.slane %v1164, %v1170
        %v1172 = vcombine.low %v1144, %v1151
        %v1174 = vunpack.c.l.s4 1983009808
        %v1175 = vunpack.c.0.s8 %v1174
        %v1176 = vlaneseq
        %v1177 = vshrl.u32 %v1176, 7
        %v1178 = vsub.s32 %v1175, %v1177
        %v1179 = vrot.slane %v1172, %v1178
        %v1180 = vcombine.low %v1154, %v1155
        %v1182 = vunpack.c.l.s4 1983009808
        %v1183 = vunpack.c.0.s8 %v1182
        %v1184 = vlaneseq
        %v1185 = vshrl.u32 %v1184, 7
        %v1186 = vsub.s32 %v1183, %v1185
        %v1187 = vrot.slane %v1180, %v1186
        %v1188 = vcombine.low %v1163, %v1171
        %v1189 = vcombine.high %v1163, %v1171
        %v1191 = vunpack.c.l.s4 1934713408
        %v1192 = vunpack.c.0.s8 %v1191
        %v1193 = vlaneseq
        %v1194 = vshrl.u32 %v1193, 7
        %v1195 = vsub.s32 %v1192, %v1194
        %v1196 = vrot.slane %v1188, %v1195
        %v1198 = vunpack.c.l.s4 1934713408
        %v1199 = vunpack.c.0.s8 %v1198
        %v1200 = vlaneseq
        %v1201 = vshrl.u32 %v1200, 7
        %v1202 = vsub.s32 %v1199, %v1201
        %v1203 = vrot.slane %v1189, %v1202
        %v1204 = vcombine.low %v1179, %v1187
        %v1205 = vcombine.high %v1179, %v1187
        %v1207 = vunpack.c.l.s4 1934713408
        %v1208 = vunpack.c.0.s8 %v1207
        %v1209 = vlaneseq
        %v1210 = vshrl.u32 %v1209, 7
        %v1211 = vsub.s32 %v1208, %v1210
        %v1212 = vrot.slane %v1204, %v1211
        %v1214 = vunpack.c.l.s4 1934713408
        %v1215 = vunpack.c.0.s8 %v1214
        %v1216 = vlaneseq
        %v1217 = vshrl.u32 %v1216, 7
        %v1218 = vsub.s32 %v1215, %v1217
        %v1219 = vrot.slane %v1205, %v1218
        %v1220 = vcombine.low %v1196, %v1212
        %v1221 = vcombine.high %v1196, %v1212
        %v1222 = vcombine.low %v1203, %v1219
        %v1223 = vcombine.high %v1203, %v1219
        %vm1224 = vcmask 130048
        %v1226 = vsel %vm1224, %v926, 0
        %v1229 = vsel %vm1224, %v1074, 0
        %1231 = vmatprep.subr.mxu0 0.0
        %1232 = vmatpush1.xpose.msra.mxu0 0.0
        %1233 = vmatprep.subr.mxu0 0.0
        %1234 = vmatpush1.xpose.msra.mxu0 0.0
        %1235 = vmatprep.subr.mxu0 0.0
        %1236 = vmatpush1.xpose.msra.mxu0 0.0
        %1237 = vmatprep.subr.mxu0 0.0
        %1238 = vmatpush1.xpose.msra.mxu0 0.0
        %1239 = vmatprep.subr.mxu0 0.0
        %1240 = vmatpush1.xpose.msra.mxu0 0.0
        %1241 = vmatprep.subr.mxu0 0.0
        %1242 = vmatpush1.xpose.msra.mxu0 0.0
        %1243 = vmatprep.subr.mxu0 0.0
        %1244 = vmatpush1.xpose.msra.mxu0 0.0
        %1245 = vmatprep.subr.mxu0 0.0
        %1246 = vmatpush1.xpose.msra.mxu0 0.0
        %1247 = vmatprep.subr.mxu0 0.0
        %1248 = vmatpush1.xpose.msra.mxu0 0.0
        %1249 = vmatprep.subr.mxu0 0.0
        %1250 = vmatpush1.xpose.msra.mxu0 0.0
        %1251 = vmatprep.subr.mxu0 0.0
        %1252 = vmatpush1.xpose.msra.mxu0 0.0
        %1253 = vmatprep.subr.mxu0 0.0
        %1254 = vmatpush1.xpose.msra.mxu0 0.0
        %1255 = vmatprep.subr.mxu0 0.0
        %1256 = vmatpush1.xpose.msra.mxu0 0.0
        %1257 = vmatprep.subr.mxu0 0.0
        %1258 = vmatpush1.xpose.msra.mxu0 0.0
        %1259 = vmatprep.subr.mxu0 0.0
        %1260 = vmatpush1.xpose.msra.mxu0 0.0
        %1261 = vmatprep.subr.mxu0 0.0
        %1262 = vmatpush1.xpose.msra.mxu0 %v1229
        %1263 = vmatprep.subr.mxu0 0.0
        %1264 = vmatpush2.xpose.msra.mxu0 0.0
        %1265 = vmatprep.subr.mxu0 0.0
        %1266 = vmatpush2.xpose.msra.mxu0 0.0
        %1267 = vmatprep.subr.mxu0 0.0
        %1268 = vmatpush2.xpose.msra.mxu0 0.0
        %1269 = vmatprep.subr.mxu0 0.0
        %1270 = vmatpush2.xpose.msra.mxu0 0.0
        %1271 = vmatprep.subr.mxu0 0.0
        %1272 = vmatpush2.xpose.msra.mxu0 0.0
        %1273 = vmatprep.subr.mxu0 0.0
        %1274 = vmatpush2.xpose.msra.mxu0 0.0
        %1275 = vmatprep.subr.mxu0 0.0
        %1276 = vmatpush2.xpose.msra.mxu0 0.0
        %1277 = vmatprep.subr.mxu0 0.0
        %1278 = vmatpush2.xpose.msra.mxu0 0.0
        %1279 = vmatprep.subr.mxu0 0.0
        %1280 = vmatpush2.xpose.msra.mxu0 0.0
        %1281 = vmatprep.subr.mxu0 0.0
        %1282 = vmatpush2.xpose.msra.mxu0 0.0
        %1283 = vmatprep.subr.mxu0 0.0
        %1284 = vmatpush2.xpose.msra.mxu0 0.0
        %1285 = vmatprep.subr.mxu0 0.0
        %1286 = vmatpush2.xpose.msra.mxu0 0.0
        %1287 = vmatprep.subr.mxu0 0.0
        %1288 = vmatpush2.xpose.msra.mxu0 0.0
        %1289 = vmatprep.subr.mxu0 0.0
        %1290 = vmatpush2.xpose.msra.mxu0 0.0
        %1291 = vmatprep.subr.mxu0 0.0
        %1292 = vmatpush2.xpose.msra.mxu0 0.0
        %1293 = vmatprep.subr.mxu0 0.0
        %1294 = vmatpush2.xpose.msra.mxu0 0.0
        %1295 = vmatprep.mubr.f32.mxu0 0.0
        %1296 = vmatmul.mubr.f32.gmra.mxu0 %v1226
        %v1297 = vpop.f32.mrf.mxu0
        %v1298 = vadd.f32 0.0, %v1297
        %v1299 = vpop.f32.mrf.mxu0
        %1300 = vdwg.mxu0
        %v1302 = vsel %vm1224, %v927, 0
        %v1305 = vsel %vm1224, %v1075, 0
        %1307 = vmatprep.subr.mxu0 0.0
        %1308 = vmatpush1.xpose.msra.mxu0 0.0
        %1309 = vmatprep.subr.mxu0 0.0
        %1310 = vmatpush1.xpose.msra.mxu0 0.0
        %1311 = vmatprep.subr.mxu0 0.0
        %1312 = vmatpush1.xpose.msra.mxu0 0.0
        %1313 = vmatprep.subr.mxu0 0.0
        %1314 = vmatpush1.xpose.msra.mxu0 0.0
        %1315 = vmatprep.subr.mxu0 0.0
        %1316 = vmatpush1.xpose.msra.mxu0 0.0
        %1317 = vmatprep.subr.mxu0 0.0
        %1318 = vmatpush1.xpose.msra.mxu0 0.0
        %1319 = vmatprep.subr.mxu0 0.0
        %1320 = vmatpush1.xpose.msra.mxu0 0.0
        %1321 = vmatprep.subr.mxu0 0.0
        %1322 = vmatpush1.xpose.msra.mxu0 0.0
        %1323 = vmatprep.subr.mxu0 0.0
        %1324 = vmatpush1.xpose.msra.mxu0 0.0
        %1325 = vmatprep.subr.mxu0 0.0
        %1326 = vmatpush1.xpose.msra.mxu0 0.0
        %1327 = vmatprep.subr.mxu0 0.0
        %1328 = vmatpush1.xpose.msra.mxu0 0.0
        %1329 = vmatprep.subr.mxu0 0.0
        %1330 = vmatpush1.xpose.msra.mxu0 0.0
        %1331 = vmatprep.subr.mxu0 0.0
        %1332 = vmatpush1.xpose.msra.mxu0 0.0
        %1333 = vmatprep.subr.mxu0 0.0
        %1334 = vmatpush1.xpose.msra.mxu0 0.0
        %1335 = vmatprep.subr.mxu0 0.0
        %1336 = vmatpush1.xpose.msra.mxu0 0.0
        %1337 = vmatprep.subr.mxu0 0.0
        %1338 = vmatpush1.xpose.msra.mxu0 %v1305
        %1339 = vmatprep.subr.mxu0 0.0
        %1340 = vmatpush2.xpose.msra.mxu0 0.0
        %1341 = vmatprep.subr.mxu0 0.0
        %1342 = vmatpush2.xpose.msra.mxu0 0.0
        %1343 = vmatprep.subr.mxu0 0.0
        %1344 = vmatpush2.xpose.msra.mxu0 0.0
        %1345 = vmatprep.subr.mxu0 0.0
        %1346 = vmatpush2.xpose.msra.mxu0 0.0
        %1347 = vmatprep.subr.mxu0 0.0
        %1348 = vmatpush2.xpose.msra.mxu0 0.0
        %1349 = vmatprep.subr.mxu0 0.0
        %1350 = vmatpush2.xpose.msra.mxu0 0.0
        %1351 = vmatprep.subr.mxu0 0.0
        %1352 = vmatpush2.xpose.msra.mxu0 0.0
        %1353 = vmatprep.subr.mxu0 0.0
        %1354 = vmatpush2.xpose.msra.mxu0 0.0
        %1355 = vmatprep.subr.mxu0 0.0
        %1356 = vmatpush2.xpose.msra.mxu0 0.0
        %1357 = vmatprep.subr.mxu0 0.0
        %1358 = vmatpush2.xpose.msra.mxu0 0.0
        %1359 = vmatprep.subr.mxu0 0.0
        %1360 = vmatpush2.xpose.msra.mxu0 0.0
        %1361 = vmatprep.subr.mxu0 0.0
        %1362 = vmatpush2.xpose.msra.mxu0 0.0
        %1363 = vmatprep.subr.mxu0 0.0
        %1364 = vmatpush2.xpose.msra.mxu0 0.0
        %1365 = vmatprep.subr.mxu0 0.0
        %1366 = vmatpush2.xpose.msra.mxu0 0.0
        %1367 = vmatprep.subr.mxu0 0.0
        %1368 = vmatpush2.xpose.msra.mxu0 0.0
        %1369 = vmatprep.subr.mxu0 0.0
        %1370 = vmatpush2.xpose.msra.mxu0 0.0
        %1371 = vmatprep.mubr.f32.mxu0 0.0
        %1372 = vmatmul.mubr.f32.gmra.mxu0 %v1302
        %v1373 = vpop.f32.mrf.mxu0
        %v1374 = vadd.f32 0.0, %v1373
        %v1375 = vpop.f32.mrf.mxu0
        %1376 = vdwg.mxu0
        %v1378 = vsel %vm1224, %v928, 0
        %v1381 = vsel %vm1224, %v1076, 0
        %1383 = vmatprep.subr.mxu0 0.0
        %1384 = vmatpush1.xpose.msra.mxu0 0.0
        %1385 = vmatprep.subr.mxu0 0.0
        %1386 = vmatpush1.xpose.msra.mxu0 0.0
        %1387 = vmatprep.subr.mxu0 0.0
        %1388 = vmatpush1.xpose.msra.mxu0 0.0
        %1389 = vmatprep.subr.mxu0 0.0
        %1390 = vmatpush1.xpose.msra.mxu0 0.0
        %1391 = vmatprep.subr.mxu0 0.0
        %1392 = vmatpush1.xpose.msra.mxu0 0.0
        %1393 = vmatprep.subr.mxu0 0.0
        %1394 = vmatpush1.xpose.msra.mxu0 0.0
        %1395 = vmatprep.subr.mxu0 0.0
        %1396 = vmatpush1.xpose.msra.mxu0 0.0
        %1397 = vmatprep.subr.mxu0 0.0
        %1398 = vmatpush1.xpose.msra.mxu0 0.0
        %1399 = vmatprep.subr.mxu0 0.0
        %1400 = vmatpush1.xpose.msra.mxu0 0.0
        %1401 = vmatprep.subr.mxu0 0.0
        %1402 = vmatpush1.xpose.msra.mxu0 0.0
        %1403 = vmatprep.subr.mxu0 0.0
        %1404 = vmatpush1.xpose.msra.mxu0 0.0
        %1405 = vmatprep.subr.mxu0 0.0
        %1406 = vmatpush1.xpose.msra.mxu0 0.0
        %1407 = vmatprep.subr.mxu0 0.0
        %1408 = vmatpush1.xpose.msra.mxu0 0.0
        %1409 = vmatprep.subr.mxu0 0.0
        %1410 = vmatpush1.xpose.msra.mxu0 0.0
        %1411 = vmatprep.subr.mxu0 0.0
        %1412 = vmatpush1.xpose.msra.mxu0 0.0
        %1413 = vmatprep.subr.mxu0 0.0
        %1414 = vmatpush1.xpose.msra.mxu0 %v1381
        %1415 = vmatprep.subr.mxu0 0.0
        %1416 = vmatpush2.xpose.msra.mxu0 0.0
        %1417 = vmatprep.subr.mxu0 0.0
        %1418 = vmatpush2.xpose.msra.mxu0 0.0
        %1419 = vmatprep.subr.mxu0 0.0
        %1420 = vmatpush2.xpose.msra.mxu0 0.0
        %1421 = vmatprep.subr.mxu0 0.0
        %1422 = vmatpush2.xpose.msra.mxu0 0.0
        %1423 = vmatprep.subr.mxu0 0.0
        %1424 = vmatpush2.xpose.msra.mxu0 0.0
        %1425 = vmatprep.subr.mxu0 0.0
        %1426 = vmatpush2.xpose.msra.mxu0 0.0
        %1427 = vmatprep.subr.mxu0 0.0
        %1428 = vmatpush2.xpose.msra.mxu0 0.0
        %1429 = vmatprep.subr.mxu0 0.0
        %1430 = vmatpush2.xpose.msra.mxu0 0.0
        %1431 = vmatprep.subr.mxu0 0.0
        %1432 = vmatpush2.xpose.msra.mxu0 0.0
        %1433 = vmatprep.subr.mxu0 0.0
        %1434 = vmatpush2.xpose.msra.mxu0 0.0
        %1435 = vmatprep.subr.mxu0 0.0
        %1436 = vmatpush2.xpose.msra.mxu0 0.0
        %1437 = vmatprep.subr.mxu0 0.0
        %1438 = vmatpush2.xpose.msra.mxu0 0.0
        %1439 = vmatprep.subr.mxu0 0.0
        %1440 = vmatpush2.xpose.msra.mxu0 0.0
        %1441 = vmatprep.subr.mxu0 0.0
        %1442 = vmatpush2.xpose.msra.mxu0 0.0
        %1443 = vmatprep.subr.mxu0 0.0
        %1444 = vmatpush2.xpose.msra.mxu0 0.0
        %1445 = vmatprep.subr.mxu0 0.0
        %1446 = vmatpush2.xpose.msra.mxu0 0.0
        %1447 = vmatprep.mubr.f32.mxu0 0.0
        %1448 = vmatmul.mubr.f32.gmra.mxu0 %v1378
        %v1449 = vpop.f32.mrf.mxu0
        %v1450 = vadd.f32 0.0, %v1449
        %v1451 = vpop.f32.mrf.mxu0
        %1452 = vdwg.mxu0
        %v1454 = vsel %vm1224, %v929, 0
        %v1457 = vsel %vm1224, %v1077, 0
        %1459 = vmatprep.subr.mxu0 0.0
        %1460 = vmatpush1.xpose.msra.mxu0 0.0
        %1461 = vmatprep.subr.mxu0 0.0
        %1462 = vmatpush1.xpose.msra.mxu0 0.0
        %1463 = vmatprep.subr.mxu0 0.0
        %1464 = vmatpush1.xpose.msra.mxu0 0.0
        %1465 = vmatprep.subr.mxu0 0.0
        %1466 = vmatpush1.xpose.msra.mxu0 0.0
        %1467 = vmatprep.subr.mxu0 0.0
        %1468 = vmatpush1.xpose.msra.mxu0 0.0
        %1469 = vmatprep.subr.mxu0 0.0
        %1470 = vmatpush1.xpose.msra.mxu0 0.0
        %1471 = vmatprep.subr.mxu0 0.0
        %1472 = vmatpush1.xpose.msra.mxu0 0.0
        %1473 = vmatprep.subr.mxu0 0.0
        %1474 = vmatpush1.xpose.msra.mxu0 0.0
        %1475 = vmatprep.subr.mxu0 0.0
        %1476 = vmatpush1.xpose.msra.mxu0 0.0
        %1477 = vmatprep.subr.mxu0 0.0
        %1478 = vmatpush1.xpose.msra.mxu0 0.0
        %1479 = vmatprep.subr.mxu0 0.0
        %1480 = vmatpush1.xpose.msra.mxu0 0.0
        %1481 = vmatprep.subr.mxu0 0.0
        %1482 = vmatpush1.xpose.msra.mxu0 0.0
        %1483 = vmatprep.subr.mxu0 0.0
        %1484 = vmatpush1.xpose.msra.mxu0 0.0
        %1485 = vmatprep.subr.mxu0 0.0
        %1486 = vmatpush1.xpose.msra.mxu0 0.0
        %1487 = vmatprep.subr.mxu0 0.0
        %1488 = vmatpush1.xpose.msra.mxu0 0.0
        %1489 = vmatprep.subr.mxu0 0.0
        %1490 = vmatpush1.xpose.msra.mxu0 %v1457
        %1491 = vmatprep.subr.mxu0 0.0
        %1492 = vmatpush2.xpose.msra.mxu0 0.0
        %1493 = vmatprep.subr.mxu0 0.0
        %1494 = vmatpush2.xpose.msra.mxu0 0.0
        %1495 = vmatprep.subr.mxu0 0.0
        %1496 = vmatpush2.xpose.msra.mxu0 0.0
        %1497 = vmatprep.subr.mxu0 0.0
        %1498 = vmatpush2.xpose.msra.mxu0 0.0
        %1499 = vmatprep.subr.mxu0 0.0
        %1500 = vmatpush2.xpose.msra.mxu0 0.0
        %1501 = vmatprep.subr.mxu0 0.0
        %1502 = vmatpush2.xpose.msra.mxu0 0.0
        %1503 = vmatprep.subr.mxu0 0.0
        %1504 = vmatpush2.xpose.msra.mxu0 0.0
        %1505 = vmatprep.subr.mxu0 0.0
        %1506 = vmatpush2.xpose.msra.mxu0 0.0
        %1507 = vmatprep.subr.mxu0 0.0
        %1508 = vmatpush2.xpose.msra.mxu0 0.0
        %1509 = vmatprep.subr.mxu0 0.0
        %1510 = vmatpush2.xpose.msra.mxu0 0.0
        %1511 = vmatprep.subr.mxu0 0.0
        %1512 = vmatpush2.xpose.msra.mxu0 0.0
        %1513 = vmatprep.subr.mxu0 0.0
        %1514 = vmatpush2.xpose.msra.mxu0 0.0
        %1515 = vmatprep.subr.mxu0 0.0
        %1516 = vmatpush2.xpose.msra.mxu0 0.0
        %1517 = vmatprep.subr.mxu0 0.0
        %1518 = vmatpush2.xpose.msra.mxu0 0.0
        %1519 = vmatprep.subr.mxu0 0.0
        %1520 = vmatpush2.xpose.msra.mxu0 0.0
        %1521 = vmatprep.subr.mxu0 0.0
        %1522 = vmatpush2.xpose.msra.mxu0 0.0
        %1523 = vmatprep.mubr.f32.mxu0 0.0
        %1524 = vmatmul.mubr.f32.gmra.mxu0 %v1454
        %v1525 = vpop.f32.mrf.mxu0
        %v1526 = vadd.f32 0.0, %v1525
        %v1527 = vpop.f32.mrf.mxu0
        %1528 = vdwg.mxu0
        %v1529 = vmul.f32 %v1298, 0.25
        %v1530 = vmul.f32 %v1374, 0.25
        %v1531 = vmul.f32 %v1450, 0.25
        %v1532 = vmul.f32 %v1526, 0.25
        %v1533 = vlaneseq
        %v1534 = vand.u32 %v1533, 127
        %vm1535 = vcmp.lt.s32.totalorder %v1534, 5
        %v1536 = vsel %vm1535, 1, 0
        %vm1537 = vcmp.eq.s32.totalorder %v1536, 1
        %v1538 = vsel %vm1537, %v1529, -1e+30
        %v1539 = vsel %vm1537, %v1530, -1e+30
        %v1540 = vsel %vm1537, %v1531, -1e+30
        %v1541 = vsel %vm1537, %v1532, -1e+30
        %vm1542 = vcmask 64512
        %v1543 = vsel %vm1542, %v1538, -inf
        %1544 = vmax.xlane.f32.xlu0 %v1543
        %v1545 = vpop.xlane.xlu0 %1544
        %v1546 = vsel %vm1542, %v1539, -inf
        %1547 = vmax.xlane.f32.xlu0 %v1546
        %v1548 = vpop.xlane.xlu0 %1547
        %v1549 = vsel %vm1542, %v1540, -inf
        %1550 = vmax.xlane.f32.xlu0 %v1549
        %v1551 = vpop.xlane.xlu0 %1550
        %v1552 = vsel %vm1542, %v1541, -inf
        %1553 = vmax.xlane.f32.xlu0 %v1552
        %v1554 = vpop.xlane.xlu0 %1553
        %v1555 = vsub.f32 %v1538, %v1545
        %v1556 = vsub.f32 %v1539, %v1548
        %v1557 = vsub.f32 %v1540, %v1551
        %v1558 = vsub.f32 %v1541, %v1554
        %v1559 = vmul.f32 %v1555, 1.442695
        %v1560 = vpow.pop %v1559
        %v1561 = vmul.f32 %v1556, 1.442695
        %v1562 = vpow.pop %v1561
        %v1563 = vmul.f32 %v1557, 1.442695
        %v1564 = vpow.pop %v1563
        %v1565 = vmul.f32 %v1558, 1.442695
        %v1566 = vpow.pop %v1565
        %v1567 = vsel %vm1542, %v1560, 0.0
        %1568 = vadd.xlane.f32.xlu0 %v1567
        %v1569 = vpop.xlane.xlu0 %1568
        %v1570 = vsel %vm1542, %v1562, 0.0
        %1571 = vadd.xlane.f32.xlu0 %v1570
        %v1572 = vpop.xlane.xlu0 %1571
        %v1573 = vsel %vm1542, %v1564, 0.0
        %1574 = vadd.xlane.f32.xlu0 %v1573
        %v1575 = vpop.xlane.xlu0 %1574
        %v1576 = vsel %vm1542, %v1566, 0.0
        %1577 = vadd.xlane.f32.xlu0 %v1576
        %v1578 = vpop.xlane.xlu0 %1577
        %v1579 = vrcp.pop %v1569
        %v1580 = vrcp.pop %v1572
        %v1581 = vrcp.pop %v1575
        %v1582 = vrcp.pop %v1578
        %v1583 = vmul.f32 %v1560, %v1579
        %v1584 = vmul.f32 %v1562, %v1580
        %v1585 = vmul.f32 %v1564, %v1581
        %v1586 = vmul.f32 %v1566, %v1582
        %v1588 = vsel %vm1542, %v1583, 0
        %1590 = vmatprep.subr.mxu0 0.0
        %1591 = vmatpush1.msra.mxu0 0.0
        %1592 = vmatprep.subr.mxu0 0.0
        %1593 = vmatpush1.msra.mxu0 0.0
        %1594 = vmatprep.subr.mxu0 0.0
        %1595 = vmatpush1.msra.mxu0 0.0
        %1596 = vmatprep.subr.mxu0 0.0
        %1597 = vmatpush1.msra.mxu0 0.0
        %1598 = vmatprep.subr.mxu0 0.0
        %1599 = vmatpush1.msra.mxu0 0.0
        %1600 = vmatprep.subr.mxu0 0.0
        %1601 = vmatpush1.msra.mxu0 0.0
        %1602 = vmatprep.subr.mxu0 0.0
        %1603 = vmatpush1.msra.mxu0 0.0
        %1604 = vmatprep.subr.mxu0 0.0
        %1605 = vmatpush1.msra.mxu0 0.0
        %1606 = vmatprep.subr.mxu0 0.0
        %1607 = vmatpush1.msra.mxu0 0.0
        %1608 = vmatprep.subr.mxu0 0.0
        %1609 = vmatpush1.msra.mxu0 0.0
        %1610 = vmatprep.subr.mxu0 0.0
        %1611 = vmatpush1.msra.mxu0 0.0
        %1612 = vmatprep.subr.mxu0 0.0
        %1613 = vmatpush1.msra.mxu0 0.0
        %1614 = vmatprep.subr.mxu0 0.0
        %1615 = vmatpush1.msra.mxu0 0.0
        %1616 = vmatprep.subr.mxu0 0.0
        %1617 = vmatpush1.msra.mxu0 0.0
        %1618 = vmatprep.subr.mxu0 0.0
        %1619 = vmatpush1.msra.mxu0 0.0
        %1620 = vmatprep.subr.mxu0 0.0
        %1621 = vmatpush1.msra.mxu0 %v1220
        %1622 = vmatprep.subr.mxu0 0.0
        %1623 = vmatpush2.msra.mxu0 0.0
        %1624 = vmatprep.subr.mxu0 0.0
        %1625 = vmatpush2.msra.mxu0 0.0
        %1626 = vmatprep.subr.mxu0 0.0
        %1627 = vmatpush2.msra.mxu0 0.0
        %1628 = vmatprep.subr.mxu0 0.0
        %1629 = vmatpush2.msra.mxu0 0.0
        %1630 = vmatprep.subr.mxu0 0.0
        %1631 = vmatpush2.msra.mxu0 0.0
        %1632 = vmatprep.subr.mxu0 0.0
        %1633 = vmatpush2.msra.mxu0 0.0
        %1634 = vmatprep.subr.mxu0 0.0
        %1635 = vmatpush2.msra.mxu0 0.0
        %1636 = vmatprep.subr.mxu0 0.0
        %1637 = vmatpush2.msra.mxu0 0.0
        %1638 = vmatprep.subr.mxu0 0.0
        %1639 = vmatpush2.msra.mxu0 0.0
        %1640 = vmatprep.subr.mxu0 0.0
        %1641 = vmatpush2.msra.mxu0 0.0
        %1642 = vmatprep.subr.mxu0 0.0
        %1643 = vmatpush2.msra.mxu0 0.0
        %1644 = vmatprep.subr.mxu0 0.0
        %1645 = vmatpush2.msra.mxu0 0.0
        %1646 = vmatprep.subr.mxu0 0.0
        %1647 = vmatpush2.msra.mxu0 0.0
        %1648 = vmatprep.subr.mxu0 0.0
        %1649 = vmatpush2.msra.mxu0 0.0
        %1650 = vmatprep.subr.mxu0 0.0
        %1651 = vmatpush2.msra.mxu0 0.0
        %1652 = vmatprep.subr.mxu0 0.0
        %1653 = vmatpush2.msra.mxu0 0.0
        %1654 = vmatprep.mubr.f32.mxu0 0.0
        %1655 = vmatmul.mubr.f32.gmra.mxu0 %v1588
        %v1656 = vpop.f32.mrf.mxu0
        %v1657 = vadd.f32 0.0, %v1656
        %v1658 = vpop.f32.mrf.mxu0
        %1659 = vdwg.mxu0
        %v1661 = vsel %vm1542, %v1584, 0
        %1663 = vmatprep.subr.mxu0 0.0
        %1664 = vmatpush1.msra.mxu0 0.0
        %1665 = vmatprep.subr.mxu0 0.0
        %1666 = vmatpush1.msra.mxu0 0.0
        %1667 = vmatprep.subr.mxu0 0.0
        %1668 = vmatpush1.msra.mxu0 0.0
        %1669 = vmatprep.subr.mxu0 0.0
        %1670 = vmatpush1.msra.mxu0 0.0
        %1671 = vmatprep.subr.mxu0 0.0
        %1672 = vmatpush1.msra.mxu0 0.0
        %1673 = vmatprep.subr.mxu0 0.0
        %1674 = vmatpush1.msra.mxu0 0.0
        %1675 = vmatprep.subr.mxu0 0.0
        %1676 = vmatpush1.msra.mxu0 0.0
        %1677 = vmatprep.subr.mxu0 0.0
        %1678 = vmatpush1.msra.mxu0 0.0
        %1679 = vmatprep.subr.mxu0 0.0
        %1680 = vmatpush1.msra.mxu0 0.0
        %1681 = vmatprep.subr.mxu0 0.0
        %1682 = vmatpush1.msra.mxu0 0.0
        %1683 = vmatprep.subr.mxu0 0.0
        %1684 = vmatpush1.msra.mxu0 0.0
        %1685 = vmatprep.subr.mxu0 0.0
        %1686 = vmatpush1.msra.mxu0 0.0
        %1687 = vmatprep.subr.mxu0 0.0
        %1688 = vmatpush1.msra.mxu0 0.0
        %1689 = vmatprep.subr.mxu0 0.0
        %1690 = vmatpush1.msra.mxu0 0.0
        %1691 = vmatprep.subr.mxu0 0.0
        %1692 = vmatpush1.msra.mxu0 0.0
        %1693 = vmatprep.subr.mxu0 0.0
        %1694 = vmatpush1.msra.mxu0 %v1221
        %1695 = vmatprep.subr.mxu0 0.0
        %1696 = vmatpush2.msra.mxu0 0.0
        %1697 = vmatprep.subr.mxu0 0.0
        %1698 = vmatpush2.msra.mxu0 0.0
        %1699 = vmatprep.subr.mxu0 0.0
        %1700 = vmatpush2.msra.mxu0 0.0
        %1701 = vmatprep.subr.mxu0 0.0
        %1702 = vmatpush2.msra.mxu0 0.0
        %1703 = vmatprep.subr.mxu0 0.0
        %1704 = vmatpush2.msra.mxu0 0.0
        %1705 = vmatprep.subr.mxu0 0.0
        %1706 = vmatpush2.msra.mxu0 0.0
        %1707 = vmatprep.subr.mxu0 0.0
        %1708 = vmatpush2.msra.mxu0 0.0
        %1709 = vmatprep.subr.mxu0 0.0
        %1710 = vmatpush2.msra.mxu0 0.0
        %1711 = vmatprep.subr.mxu0 0.0
        %1712 = vmatpush2.msra.mxu0 0.0
        %1713 = vmatprep.subr.mxu0 0.0
        %1714 = vmatpush2.msra.mxu0 0.0
        %1715 = vmatprep.subr.mxu0 0.0
        %1716 = vmatpush2.msra.mxu0 0.0
        %1717 = vmatprep.subr.mxu0 0.0
        %1718 = vmatpush2.msra.mxu0 0.0
        %1719 = vmatprep.subr.mxu0 0.0
        %1720 = vmatpush2.msra.mxu0 0.0
        %1721 = vmatprep.subr.mxu0 0.0
        %1722 = vmatpush2.msra.mxu0 0.0
        %1723 = vmatprep.subr.mxu0 0.0
        %1724 = vmatpush2.msra.mxu0 0.0
        %1725 = vmatprep.subr.mxu0 0.0
        %1726 = vmatpush2.msra.mxu0 0.0
        %1727 = vmatprep.mubr.f32.mxu0 0.0
        %1728 = vmatmul.mubr.f32.gmra.mxu0 %v1661
        %v1729 = vpop.f32.mrf.mxu0
        %v1730 = vadd.f32 0.0, %v1729
        %v1731 = vpop.f32.mrf.mxu0
        %1732 = vdwg.mxu0
        %v1734 = vsel %vm1542, %v1585, 0
        %1736 = vmatprep.subr.mxu0 0.0
        %1737 = vmatpush1.msra.mxu0 0.0
        %1738 = vmatprep.subr.mxu0 0.0
        %1739 = vmatpush1.msra.mxu0 0.0
        %1740 = vmatprep.subr.mxu0 0.0
        %1741 = vmatpush1.msra.mxu0 0.0
        %1742 = vmatprep.subr.mxu0 0.0
        %1743 = vmatpush1.msra.mxu0 0.0
        %1744 = vmatprep.subr.mxu0 0.0
        %1745 = vmatpush1.msra.mxu0 0.0
        %1746 = vmatprep.subr.mxu0 0.0
        %1747 = vmatpush1.msra.mxu0 0.0
        %1748 = vmatprep.subr.mxu0 0.0
        %1749 = vmatpush1.msra.mxu0 0.0
        %1750 = vmatprep.subr.mxu0 0.0
        %1751 = vmatpush1.msra.mxu0 0.0
        %1752 = vmatprep.subr.mxu0 0.0
        %1753 = vmatpush1.msra.mxu0 0.0
        %1754 = vmatprep.subr.mxu0 0.0
        %1755 = vmatpush1.msra.mxu0 0.0
        %1756 = vmatprep.subr.mxu0 0.0
        %1757 = vmatpush1.msra.mxu0 0.0
        %1758 = vmatprep.subr.mxu0 0.0
        %1759 = vmatpush1.msra.mxu0 0.0
        %1760 = vmatprep.subr.mxu0 0.0
        %1761 = vmatpush1.msra.mxu0 0.0
        %1762 = vmatprep.subr.mxu0 0.0
        %1763 = vmatpush1.msra.mxu0 0.0
        %1764 = vmatprep.subr.mxu0 0.0
        %1765 = vmatpush1.msra.mxu0 0.0
        %1766 = vmatprep.subr.mxu0 0.0
        %1767 = vmatpush1.msra.mxu0 %v1222
        %1768 = vmatprep.subr.mxu0 0.0
        %1769 = vmatpush2.msra.mxu0 0.0
        %1770 = vmatprep.subr.mxu0 0.0
        %1771 = vmatpush2.msra.mxu0 0.0
        %1772 = vmatprep.subr.mxu0 0.0
        %1773 = vmatpush2.msra.mxu0 0.0
        %1774 = vmatprep.subr.mxu0 0.0
        %1775 = vmatpush2.msra.mxu0 0.0
        %1776 = vmatprep.subr.mxu0 0.0
        %1777 = vmatpush2.msra.mxu0 0.0
        %1778 = vmatprep.subr.mxu0 0.0
        %1779 = vmatpush2.msra.mxu0 0.0
        %1780 = vmatprep.subr.mxu0 0.0
        %1781 = vmatpush2.msra.mxu0 0.0
        %1782 = vmatprep.subr.mxu0 0.0
        %1783 = vmatpush2.msra.mxu0 0.0
        %1784 = vmatprep.subr.mxu0 0.0
        %1785 = vmatpush2.msra.mxu0 0.0
        %1786 = vmatprep.subr.mxu0 0.0
        %1787 = vmatpush2.msra.mxu0 0.0
        %1788 = vmatprep.subr.mxu0 0.0
        %1789 = vmatpush2.msra.mxu0 0.0
        %1790 = vmatprep.subr.mxu0 0.0
        %1791 = vmatpush2.msra.mxu0 0.0
        %1792 = vmatprep.subr.mxu0 0.0
        %1793 = vmatpush2.msra.mxu0 0.0
        %1794 = vmatprep.subr.mxu0 0.0
        %1795 = vmatpush2.msra.mxu0 0.0
        %1796 = vmatprep.subr.mxu0 0.0
        %1797 = vmatpush2.msra.mxu0 0.0
        %1798 = vmatprep.subr.mxu0 0.0
        %1799 = vmatpush2.msra.mxu0 0.0
        %1800 = vmatprep.mubr.f32.mxu0 0.0
        %1801 = vmatmul.mubr.f32.gmra.mxu0 %v1734
        %v1802 = vpop.f32.mrf.mxu0
        %v1803 = vadd.f32 0.0, %v1802
        %v1804 = vpop.f32.mrf.mxu0
        %1805 = vdwg.mxu0
        %v1807 = vsel %vm1542, %v1586, 0
        %1809 = vmatprep.subr.mxu0 0.0
        %1810 = vmatpush1.msra.mxu0 0.0
        %1811 = vmatprep.subr.mxu0 0.0
        %1812 = vmatpush1.msra.mxu0 0.0
        %1813 = vmatprep.subr.mxu0 0.0
        %1814 = vmatpush1.msra.mxu0 0.0
        %1815 = vmatprep.subr.mxu0 0.0
        %1816 = vmatpush1.msra.mxu0 0.0
        %1817 = vmatprep.subr.mxu0 0.0
        %1818 = vmatpush1.msra.mxu0 0.0
        %1819 = vmatprep.subr.mxu0 0.0
        %1820 = vmatpush1.msra.mxu0 0.0
        %1821 = vmatprep.subr.mxu0 0.0
        %1822 = vmatpush1.msra.mxu0 0.0
        %1823 = vmatprep.subr.mxu0 0.0
        %1824 = vmatpush1.msra.mxu0 0.0
        %1825 = vmatprep.subr.mxu0 0.0
        %1826 = vmatpush1.msra.mxu0 0.0
        %1827 = vmatprep.subr.mxu0 0.0
        %1828 = vmatpush1.msra.mxu0 0.0
        %1829 = vmatprep.subr.mxu0 0.0
        %1830 = vmatpush1.msra.mxu0 0.0
        %1831 = vmatprep.subr.mxu0 0.0
        %1832 = vmatpush1.msra.mxu0 0.0
        %1833 = vmatprep.subr.mxu0 0.0
        %1834 = vmatpush1.msra.mxu0 0.0
        %1835 = vmatprep.subr.mxu0 0.0
        %1836 = vmatpush1.msra.mxu0 0.0
        %1837 = vmatprep.subr.mxu0 0.0
        %1838 = vmatpush1.msra.mxu0 0.0
        %1839 = vmatprep.subr.mxu0 0.0
        %1840 = vmatpush1.msra.mxu0 %v1223
        %1841 = vmatprep.subr.mxu0 0.0
        %1842 = vmatpush2.msra.mxu0 0.0
        %1843 = vmatprep.subr.mxu0 0.0
        %1844 = vmatpush2.msra.mxu0 0.0
        %1845 = vmatprep.subr.mxu0 0.0
        %1846 = vmatpush2.msra.mxu0 0.0
        %1847 = vmatprep.subr.mxu0 0.0
        %1848 = vmatpush2.msra.mxu0 0.0
        %1849 = vmatprep.subr.mxu0 0.0
        %1850 = vmatpush2.msra.mxu0 0.0
        %1851 = vmatprep.subr.mxu0 0.0
        %1852 = vmatpush2.msra.mxu0 0.0
        %1853 = vmatprep.subr.mxu0 0.0
        %1854 = vmatpush2.msra.mxu0 0.0
        %1855 = vmatprep.subr.mxu0 0.0
        %1856 = vmatpush2.msra.mxu0 0.0
        %1857 = vmatprep.subr.mxu0 0.0
        %1858 = vmatpush2.msra.mxu0 0.0
        %1859 = vmatprep.subr.mxu0 0.0
        %1860 = vmatpush2.msra.mxu0 0.0
        %1861 = vmatprep.subr.mxu0 0.0
        %1862 = vmatpush2.msra.mxu0 0.0
        %1863 = vmatprep.subr.mxu0 0.0
        %1864 = vmatpush2.msra.mxu0 0.0
        %1865 = vmatprep.subr.mxu0 0.0
        %1866 = vmatpush2.msra.mxu0 0.0
        %1867 = vmatprep.subr.mxu0 0.0
        %1868 = vmatpush2.msra.mxu0 0.0
        %1869 = vmatprep.subr.mxu0 0.0
        %1870 = vmatpush2.msra.mxu0 0.0
        %1871 = vmatprep.subr.mxu0 0.0
        %1872 = vmatpush2.msra.mxu0 0.0
        %1873 = vmatprep.mubr.f32.mxu0 0.0
        %1874 = vmatmul.mubr.f32.gmra.mxu0 %v1807
        %v1875 = vpop.f32.mrf.mxu0
        %v1876 = vadd.f32 0.0, %v1875
        %v1877 = vpop.f32.mrf.mxu0
        %1878 = vdwg.mxu0
        %v1879 = vcombine.low %v1657, %v1803
        %v1880 = vcombine.high %v1657, %v1803
        %v1882 = vunpack.c.l.s4 1983009808
        %v1883 = vunpack.c.0.s8 %v1882
        %v1884 = vlaneseq
        %v1885 = vshrl.u32 %v1884, 7
        %v1886 = vsub.s32 %v1883, %v1885
        %v1887 = vrot.slane %v1879, %v1886
        %v1889 = vunpack.c.l.s4 1983009808
        %v1890 = vunpack.c.0.s8 %v1889
        %v1891 = vlaneseq
        %v1892 = vshrl.u32 %v1891, 7
        %v1893 = vsub.s32 %v1890, %v1892
        %v1894 = vrot.slane %v1880, %v1893
        %v1895 = vcombine.low %v1730, %v1876
        %v1896 = vcombine.high %v1730, %v1876
        %v1898 = vunpack.c.l.s4 1983009808
        %v1899 = vunpack.c.0.s8 %v1898
        %v1900 = vlaneseq
        %v1901 = vshrl.u32 %v1900, 7
        %v1902 = vsub.s32 %v1899, %v1901
        %v1903 = vrot.slane %v1895, %v1902
        %v1905 = vunpack.c.l.s4 1983009808
        %v1906 = vunpack.c.0.s8 %v1905
        %v1907 = vlaneseq
        %v1908 = vshrl.u32 %v1907, 7
        %v1909 = vsub.s32 %v1906, %v1908
        %v1910 = vrot.slane %v1896, %v1909
        %v1911 = vcombine.low %v1887, %v1903
        %v1912 = vcombine.high %v1887, %v1903
        %v1914 = vunpack.c.l.s4 1934713408
        %v1915 = vunpack.c.0.s8 %v1914
        %v1916 = vlaneseq
        %v1917 = vshrl.u32 %v1916, 7
        %v1918 = vsub.s32 %v1915, %v1917
        %v1919 = vrot.slane %v1911, %v1918
        %v1921 = vunpack.c.l.s4 1934713408
        %v1922 = vunpack.c.0.s8 %v1921
        %v1923 = vlaneseq
        %v1924 = vshrl.u32 %v1923, 7
        %v1925 = vsub.s32 %v1922, %v1924
        %v1926 = vrot.slane %v1912, %v1925
        %v1927 = vcombine.low %v1894, %v1910
        %v1928 = vcombine.high %v1894, %v1910
        %v1930 = vunpack.c.l.s4 1934713408
        %v1931 = vunpack.c.0.s8 %v1930
        %v1932 = vlaneseq
        %v1933 = vshrl.u32 %v1932, 7
        %v1934 = vsub.s32 %v1931, %v1933
        %v1935 = vrot.slane %v1927, %v1934
        %v1937 = vunpack.c.l.s4 1934713408
        %v1938 = vunpack.c.0.s8 %v1937
        %v1939 = vlaneseq
        %v1940 = vshrl.u32 %v1939, 7
        %v1941 = vsub.s32 %v1938, %v1940
        %v1942 = vrot.slane %v1928, %v1941
        %v1943 = vcombine.high %v1919, 0.0
        %v1944 = vcombine.high %v1926, 0.0
        %v1945 = vcombine.high %v1935, 0.0
        %v1946 = vcombine.high %v1942, 0.0
        %v1947 = vcombine.low %v1919, %v1926
        %v1949 = vunpack.c.l.s4 1983009808
        %v1950 = vunpack.c.0.s8 %v1949
        %v1951 = vlaneseq
        %v1952 = vshrl.u32 %v1951, 7
        %v1953 = vsub.s32 %v1950, %v1952
        %v1954 = vrot.slane %v1947, %v1953
        %v1955 = vcombine.low %v1943, %v1944
        %v1957 = vunpack.c.l.s4 1983009808
        %v1958 = vunpack.c.0.s8 %v1957
        %v1959 = vlaneseq
        %v1960 = vshrl.u32 %v1959, 7
        %v1961 = vsub.s32 %v1958, %v1960
        %v1962 = vrot.slane %v1955, %v1961
        %v1963 = vcombine.low %v1935, %v1942
        %v1965 = vunpack.c.l.s4 1983009808
        %v1966 = vunpack.c.0.s8 %v1965
        %v1967 = vlaneseq
        %v1968 = vshrl.u32 %v1967, 7
        %v1969 = vsub.s32 %v1966, %v1968
        %v1970 = vrot.slane %v1963, %v1969
        %v1971 = vcombine.low %v1945, %v1946
        %v1973 = vunpack.c.l.s4 1983009808
        %v1974 = vunpack.c.0.s8 %v1973
        %v1975 = vlaneseq
        %v1976 = vshrl.u32 %v1975, 7
        %v1977 = vsub.s32 %v1974, %v1976
        %v1978 = vrot.slane %v1971, %v1977
        %v1979 = vcombine.low %v1954, %v1962
        %v1980 = vcombine.high %v1954, %v1962
        %v1982 = vunpack.c.l.s4 1934713408
        %v1983 = vunpack.c.0.s8 %v1982
        %v1984 = vlaneseq
        %v1985 = vshrl.u32 %v1984, 7
        %v1986 = vsub.s32 %v1983, %v1985
        %v1987 = vrot.slane %v1979, %v1986
        %v1989 = vunpack.c.l.s4 1934713408
        %v1990 = vunpack.c.0.s8 %v1989
        %v1991 = vlaneseq
        %v1992 = vshrl.u32 %v1991, 7
        %v1993 = vsub.s32 %v1990, %v1992
        %v1994 = vrot.slane %v1980, %v1993
        %v1995 = vcombine.low %v1970, %v1978
        %v1996 = vcombine.high %v1970, %v1978
        %v1998 = vunpack.c.l.s4 1934713408
        %v1999 = vunpack.c.0.s8 %v1998
        %v2000 = vlaneseq
        %v2001 = vshrl.u32 %v2000, 7
        %v2002 = vsub.s32 %v1999, %v2001
        %v2003 = vrot.slane %v1995, %v2002
        %v2005 = vunpack.c.l.s4 1934713408
        %v2006 = vunpack.c.0.s8 %v2005
        %v2007 = vlaneseq
        %v2008 = vshrl.u32 %v2007, 7
        %v2009 = vsub.s32 %v2006, %v2008
        %v2010 = vrot.slane %v1996, %v2009
        %v2011 = vcombine.low %v1987, %v2003
        %v2012 = vcombine.high %v1987, %v2003
        %v2013 = vcombine.low %v1994, %v2010
        %v2014 = vcombine.high %v1994, %v2010
        %2016 = vrot.lane.b32.xlu0 %v2012, 16
        %v2017 = vpop.permute.xlu0 %2016
        %2020 = vrot.lane.b32.xlu0 %v2013, 32
        %v2021 = vpop.permute.xlu0 %2020
        %2024 = vrot.lane.b32.xlu0 %v2014, 48
        %v2025 = vpop.permute.xlu0 %2024
        %v2027 = vsel %vm1224, %v2011, %v2017
        %vm2028 = vcmask 261120
        %v2029 = vsel %vm2028, %v2027, %v2021
        %vm2030 = vcmask 392192
        %v2031 = vsel %vm2030, %v2029, %v2025
        %v2032 = vpack.c.bf16 %v2031, %v2031
        %v2033 = vld [vmem:[%s453] sm:$0xf]
        %v2034 = vld [vmem:[%s453 + $0x4] sm:$0xf]
        %v2035 = vld [vmem:[%s453 + $0x8] sm:$0xf]
        %v2036 = vld [vmem:[%s453 + $0xc] sm:$0xf]
        %v2037 = vld [vmem:[%s453 + $0x10] sm:$0xf]
        %v2038 = vld [vmem:[%s453 + $0x14] sm:$0xf]
        %v2039 = vld [vmem:[%s453 + $0x18] sm:$0xf]
        %v2040 = vld [vmem:[%s453 + $0x1c] sm:$0xf]
        %v2041 = vlaneseq
        %v2042 = vshrl.u32 %v2041, 7
        %v2043 = vsub.s32 4, %v2042
        %v2044 = vrot.slane %v655, %v2043
        %v2053 = vunpack.c.l.b16 %v2033
        %v2054 = vunpack.c.l.b16 %v2034
        %v2055 = vunpack.c.l.b16 %v2035
        %v2056 = vunpack.c.l.b16 %v2036
        %v2057 = vunpack.c.l.b16 %v2037
        %v2058 = vunpack.c.l.b16 %v2038
        %v2059 = vunpack.c.l.b16 %v2039
        %v2060 = vunpack.c.l.b16 %v2040
        %v2061 = vpack.c.b16 %v2054, %v2053
        %v2062 = vpack.c.b16 %v2056, %v2055
        %v2063 = vpack.c.b16 %v2058, %v2057
        %v2064 = vpack.c.b16 %v2060, %v2059
        %v2070 = vsel %vm658, %v2032, 0
        %2072 = vmatprep.subr.bf16.mxu0 0
        %2073 = vmatpush1.bf16.msra.mxu0 0
        %2074 = vmatprep.subr.bf16.mxu0 0
        %2075 = vmatpush1.bf16.msra.mxu0 0
        %2076 = vmatprep.subr.bf16.mxu0 0
        %2077 = vmatpush1.bf16.msra.mxu0 0
        %2078 = vmatprep.subr.bf16.mxu0 0
        %2079 = vmatpush1.bf16.msra.mxu0 0
        %2080 = vmatprep.subr.bf16.mxu0 0
        %2081 = vmatpush1.bf16.msra.mxu0 %v2064
        %2082 = vmatprep.subr.bf16.mxu0 0
        %2083 = vmatpush1.bf16.msra.mxu0 %v2063
        %2084 = vmatprep.subr.bf16.mxu0 0
        %2085 = vmatpush1.bf16.msra.mxu0 %v2062
        %2086 = vmatprep.subr.bf16.mxu0 0
        %2087 = vmatpush1.bf16.msra.mxu0 %v2061
        %2088 = vmatprep.subr.bf16.mxu0 0
        %2089 = vmatpush2.bf16.msra.mxu0 0
        %2090 = vmatprep.subr.bf16.mxu0 0
        %2091 = vmatpush2.bf16.msra.mxu0 0
        %2092 = vmatprep.subr.bf16.mxu0 0
        %2093 = vmatpush2.bf16.msra.mxu0 0
        %2094 = vmatprep.subr.bf16.mxu0 0
        %2095 = vmatpush2.bf16.msra.mxu0 0
        %2096 = vmatprep.subr.bf16.mxu0 0
        %2097 = vmatpush2.bf16.msra.mxu0 0
        %2098 = vmatprep.subr.bf16.mxu0 0
        %2099 = vmatpush2.bf16.msra.mxu0 0
        %2100 = vmatprep.subr.bf16.mxu0 0
        %2101 = vmatpush2.bf16.msra.mxu0 0
        %2102 = vmatprep.subr.bf16.mxu0 0
        %2103 = vmatpush2.bf16.msra.mxu0 0
        %2104 = vmatprep.mubr.bf16.mxu0 0
        %2105 = vmatmul.mubr.bf16.gmra.mxu0 %v2070
        %v2106 = vpop.f32.mrf.mxu0
        %v2107 = vadd.f32 %v2044, %v2106
        %v2108 = vpop.f32.mrf.mxu0
        %v2109 = vpop.f32.mrf.mxu0
        %v2110 = vpop.f32.mrf.mxu0
        %2111 = vdwg.mxu0
        %v2112 = vadd.f32 %v657, %v2107
        %v2113 = vsel %vm658, %v2112, 0.0
        %2114 = vadd.xlane.f32.xlu0 %v2113
        %v2115 = vpop.xlane.xlu0 %2114
        %v2116 = vmul.f32 %v2115, %v662
        %v2117 = vsub.f32 %v2112, %v2116
        %v2118 = vmul.f32 %v2117, %v2117
        %v2119 = vsel %vm658, %v2118, 0.0
        %2120 = vadd.xlane.f32.xlu0 %v2119
        %v2121 = vpop.xlane.xlu0 %2120
        %v2122 = vmul.f32 %v2121, %v662
        %v2123 = vadd.f32 %v2122, 1e-05
        %v2124 = vrsqrt.pop %v2123
        %v2125 = vmul.f32 %v2117, %v2124
        %v2126 = vlaneseq
        %v2127 = vshrl.u32 %v2126, 7
        %v2128 = vsub.s32 2, %v2127
        %v2129 = vrot.slane %v655, %v2128
        %v2130 = vmul.f32 %v2125, %v2129
        %v2131 = vlaneseq
        %v2132 = vshrl.u32 %v2131, 7
        %v2133 = vsub.s32 3, %v2132
        %v2134 = vrot.slane %v655, %v2133
        %v2135 = vadd.f32 %v2130, %v2134
        %v2136 = vpack.c.bf16 %v2135, %v2135
        %v2137 = vld [vmem:[%s458] sm:$0xff]
        %v2138 = vld [vmem:[%s458 + $0x8] sm:$0xff]
        %v2139 = vld [vmem:[%s458 + $0x10] sm:$0xff]
        %v2140 = vld [vmem:[%s458 + $0x18] sm:$0xff]
        %v2141 = vld [vmem:[%s458 + $0x20] sm:$0xff]
        %v2142 = vld [vmem:[%s458 + $0x28] sm:$0xff]
        %v2143 = vld [vmem:[%s458 + $0x30] sm:$0xff]
        %v2144 = vld [vmem:[%s458 + $0x38] sm:$0xff]
        %v2145 = vlaneseq
        %v2146 = vshrl.u32 %v2145, 7
        %v2147 = vsub.s32 7, %v2146
        %v2148 = vrot.slane %v655, %v2147
        %v2149 = vlaneseq
        %v2150 = vshrl.u32 %v2149, 7
        %v2151 = vsub.s32 7, %v2150
        %v2152 = vrot.slane %v656, %v2151
        %v2161 = vunpack.c.l.b16 %v2137
        %v2162 = vunpack.c.h.b16 %v2137
        %v2163 = vunpack.c.l.b16 %v2138
        %v2164 = vunpack.c.h.b16 %v2138
        %v2165 = vunpack.c.l.b16 %v2139
        %v2166 = vunpack.c.h.b16 %v2139
        %v2167 = vunpack.c.l.b16 %v2140
        %v2168 = vunpack.c.h.b16 %v2140
        %v2169 = vunpack.c.l.b16 %v2141
        %v2170 = vunpack.c.h.b16 %v2141
        %v2171 = vunpack.c.l.b16 %v2142
        %v2172 = vunpack.c.h.b16 %v2142
        %v2173 = vunpack.c.l.b16 %v2143
        %v2174 = vunpack.c.h.b16 %v2143
        %v2175 = vunpack.c.l.b16 %v2144
        %v2176 = vunpack.c.h.b16 %v2144
        %v2177 = vpack.c.b16 %v2163, %v2161
        %v2178 = vpack.c.b16 %v2164, %v2162
        %v2179 = vpack.c.b16 %v2167, %v2165
        %v2180 = vpack.c.b16 %v2168, %v2166
        %v2181 = vpack.c.b16 %v2171, %v2169
        %v2182 = vpack.c.b16 %v2172, %v2170
        %v2183 = vpack.c.b16 %v2175, %v2173
        %v2184 = vpack.c.b16 %v2176, %v2174
        %v2194 = vsel %vm658, %v2136, 0
        %2196 = vmatprep.subr.bf16.mxu0 0
        %2197 = vmatpush1.bf16.msra.mxu0 0
        %2198 = vmatprep.subr.bf16.mxu0 0
        %2199 = vmatpush1.bf16.msra.mxu0 0
        %2200 = vmatprep.subr.bf16.mxu0 0
        %2201 = vmatpush1.bf16.msra.mxu0 0
        %2202 = vmatprep.subr.bf16.mxu0 0
        %2203 = vmatpush1.bf16.msra.mxu0 0
        %2204 = vmatprep.subr.bf16.mxu0 %v2184
        %2205 = vmatpush1.bf16.msra.mxu0 %v2183
        %2206 = vmatprep.subr.bf16.mxu0 %v2182
        %2207 = vmatpush1.bf16.msra.mxu0 %v2181
        %2208 = vmatprep.subr.bf16.mxu0 %v2180
        %2209 = vmatpush1.bf16.msra.mxu0 %v2179
        %2210 = vmatprep.subr.bf16.mxu0 %v2178
        %2211 = vmatpush1.bf16.msra.mxu0 %v2177
        %2212 = vmatprep.subr.bf16.mxu0 0
        %2213 = vmatpush2.bf16.msra.mxu0 0
        %2214 = vmatprep.subr.bf16.mxu0 0
        %2215 = vmatpush2.bf16.msra.mxu0 0
        %2216 = vmatprep.subr.bf16.mxu0 0
        %2217 = vmatpush2.bf16.msra.mxu0 0
        %2218 = vmatprep.subr.bf16.mxu0 0
        %2219 = vmatpush2.bf16.msra.mxu0 0
        %2220 = vmatprep.subr.bf16.mxu0 0
        %2221 = vmatpush2.bf16.msra.mxu0 0
        %2222 = vmatprep.subr.bf16.mxu0 0
        %2223 = vmatpush2.bf16.msra.mxu0 0
        %2224 = vmatprep.subr.bf16.mxu0 0
        %2225 = vmatpush2.bf16.msra.mxu0 0
        %2226 = vmatprep.subr.bf16.mxu0 0
        %2227 = vmatpush2.bf16.msra.mxu0 0
        %2228 = vmatprep.mubr.bf16.mxu0 0
        %2229 = vmatmul.mubr.bf16.gmra.mxu0 %v2194
        %v2230 = vpop.f32.mrf.mxu0
        %v2231 = vadd.f32 %v2148, %v2230
        %v2232 = vpop.f32.mrf.mxu0
        %v2233 = vadd.f32 %v2152, %v2232
        %v2234 = vpop.f32.mrf.mxu0
        %v2235 = vpop.f32.mrf.mxu0
        %2236 = vdwg.mxu0
        %v2237 = vmul.f32 %v2231, 1.702
        %v2238 = vmul.f32 %v2233, 1.702
        %v2239 = vxor.u32 %v2237, 2147483648
        %v2240 = vxor.u32 %v2238, 2147483648
        %v2241 = vmul.f32 %v2239, 1.442695
        %v2242 = vpow.pop %v2241
        %v2243 = vmul.f32 %v2240, 1.442695
        %v2244 = vpow.pop %v2243
        %v2245 = vadd.f32 %v2242, 1.0
        %v2246 = vadd.f32 %v2244, 1.0
        %v2247 = vrcp.pop %v2245
        %v2248 = vmul.f32 1.0, %v2247
        %v2249 = vrcp.pop %v2246
        %v2250 = vmul.f32 1.0, %v2249
        %v2251 = vmul.f32 %v2231, %v2248
        %v2252 = vmul.f32 %v2233, %v2250
        %v2253 = vpack.c.bf16 %v2251, %v2251
        %v2254 = vpack.c.bf16 %v2252, %v2252
        %v2255 = vld [vmem:[%s463] sm:$0xf]
        %v2256 = vld [vmem:[%s463 + $0x4] sm:$0xf]
        %v2257 = vld [vmem:[%s463 + $0x8] sm:$0xf]
        %v2258 = vld [vmem:[%s463 + $0xc] sm:$0xf]
        %v2259 = vld [vmem:[%s463 + $0x10] sm:$0xf]
        %v2260 = vld [vmem:[%s463 + $0x14] sm:$0xf]
        %v2261 = vld [vmem:[%s463 + $0x18] sm:$0xf]
        %v2262 = vld [vmem:[%s463 + $0x1c] sm:$0xf]
        %v2263 = vld [vmem:[%s463 + $0x20] sm:$0xf]
        %v2264 = vld [vmem:[%s463 + $0x24] sm:$0xf]
        %v2265 = vld [vmem:[%s463 + $0x28] sm:$0xf]
        %v2266 = vld [vmem:[%s463 + $0x2c] sm:$0xf]
        %v2267 = vld [vmem:[%s463 + $0x30] sm:$0xf]
        %v2268 = vld [vmem:[%s463 + $0x34] sm:$0xf]
        %v2269 = vld [vmem:[%s463 + $0x38] sm:$0xf]
        %v2270 = vld [vmem:[%s463 + $0x3c] sm:$0xf]
        %v2271 = vld [vmem:[%s463 + $0x40] sm:$0xf]
        %v2272 = vld [vmem:[%s463 + $0x44] sm:$0xf]
        %v2273 = vld [vmem:[%s463 + $0x48] sm:$0xf]
        %v2274 = vld [vmem:[%s463 + $0x4c] sm:$0xf]
        %v2275 = vld [vmem:[%s463 + $0x50] sm:$0xf]
        %v2276 = vld [vmem:[%s463 + $0x54] sm:$0xf]
        %v2277 = vld [vmem:[%s463 + $0x58] sm:$0xf]
        %v2278 = vld [vmem:[%s463 + $0x5c] sm:$0xf]
        %v2279 = vld [vmem:[%s463 + $0x60] sm:$0xf]
        %v2280 = vld [vmem:[%s463 + $0x64] sm:$0xf]
        %v2281 = vld [vmem:[%s463 + $0x68] sm:$0xf]
        %v2282 = vld [vmem:[%s463 + $0x6c] sm:$0xf]
        %v2283 = vld [vmem:[%s463 + $0x70] sm:$0xf]
        %v2284 = vld [vmem:[%s463 + $0x74] sm:$0xf]
        %v2285 = vld [vmem:[%s463 + $0x78] sm:$0xf]
        %v2286 = vld [vmem:[%s463 + $0x7c] sm:$0xf]
        %v2287 = vlaneseq
        %v2288 = vshrl.u32 %v2287, 7
        %v2289 = vsub.s32 5, %v2288
        %v2290 = vrot.slane %v655, %v2289
        %v2323 = vunpack.c.l.b16 %v2255
        %v2324 = vunpack.c.l.b16 %v2256
        %v2325 = vunpack.c.l.b16 %v2257
        %v2326 = vunpack.c.l.b16 %v2258
        %v2327 = vunpack.c.l.b16 %v2259
        %v2328 = vunpack.c.l.b16 %v2260
        %v2329 = vunpack.c.l.b16 %v2261
        %v2330 = vunpack.c.l.b16 %v2262
        %v2331 = vunpack.c.l.b16 %v2263
        %v2332 = vunpack.c.l.b16 %v2264
        %v2333 = vunpack.c.l.b16 %v2265
        %v2334 = vunpack.c.l.b16 %v2266
        %v2335 = vunpack.c.l.b16 %v2267
        %v2336 = vunpack.c.l.b16 %v2268
        %v2337 = vunpack.c.l.b16 %v2269
        %v2338 = vunpack.c.l.b16 %v2270
        %v2339 = vunpack.c.l.b16 %v2271
        %v2340 = vunpack.c.l.b16 %v2272
        %v2341 = vunpack.c.l.b16 %v2273
        %v2342 = vunpack.c.l.b16 %v2274
        %v2343 = vunpack.c.l.b16 %v2275
        %v2344 = vunpack.c.l.b16 %v2276
        %v2345 = vunpack.c.l.b16 %v2277
        %v2346 = vunpack.c.l.b16 %v2278
        %v2347 = vunpack.c.l.b16 %v2279
        %v2348 = vunpack.c.l.b16 %v2280
        %v2349 = vunpack.c.l.b16 %v2281
        %v2350 = vunpack.c.l.b16 %v2282
        %v2351 = vunpack.c.l.b16 %v2283
        %v2352 = vunpack.c.l.b16 %v2284
        %v2353 = vunpack.c.l.b16 %v2285
        %v2354 = vunpack.c.l.b16 %v2286
        %v2355 = vpack.c.b16 %v2324, %v2323
        %v2356 = vpack.c.b16 %v2326, %v2325
        %v2357 = vpack.c.b16 %v2328, %v2327
        %v2358 = vpack.c.b16 %v2330, %v2329
        %v2359 = vpack.c.b16 %v2332, %v2331
        %v2360 = vpack.c.b16 %v2334, %v2333
        %v2361 = vpack.c.b16 %v2336, %v2335
        %v2362 = vpack.c.b16 %v2338, %v2337
        %v2363 = vpack.c.b16 %v2340, %v2339
        %v2364 = vpack.c.b16 %v2342, %v2341
        %v2365 = vpack.c.b16 %v2344, %v2343
        %v2366 = vpack.c.b16 %v2346, %v2345
        %v2367 = vpack.c.b16 %v2348, %v2347
        %v2368 = vpack.c.b16 %v2350, %v2349
        %v2369 = vpack.c.b16 %v2352, %v2351
        %v2370 = vpack.c.b16 %v2354, %v2353
        %2387 = vmatprep.subr.bf16.mxu0 0
        %2388 = vmatpush1.bf16.msra.mxu0 %v2362
        %2389 = vmatprep.subr.bf16.mxu0 0
        %2390 = vmatpush1.bf16.msra.mxu0 %v2361
        %2391 = vmatprep.subr.bf16.mxu0 0
        %2392 = vmatpush1.bf16.msra.mxu0 %v2360
        %2393 = vmatprep.subr.bf16.mxu0 0
        %2394 = vmatpush1.bf16.msra.mxu0 %v2359
        %2395 = vmatprep.subr.bf16.mxu0 0
        %2396 = vmatpush1.bf16.msra.mxu0 %v2358
        %2397 = vmatprep.subr.bf16.mxu0 0
        %2398 = vmatpush1.bf16.msra.mxu0 %v2357
        %2399 = vmatprep.subr.bf16.mxu0 0
        %2400 = vmatpush1.bf16.msra.mxu0 %v2356
        %2401 = vmatprep.subr.bf16.mxu0 0
        %2402 = vmatpush1.bf16.msra.mxu0 %v2355
        %2403 = vmatprep.subr.bf16.mxu0 0
        %2404 = vmatpush2.bf16.msra.mxu0 %v2370
        %2405 = vmatprep.subr.bf16.mxu0 0
        %2406 = vmatpush2.bf16.msra.mxu0 %v2369
        %2407 = vmatprep.subr.bf16.mxu0 0
        %2408 = vmatpush2.bf16.msra.mxu0 %v2368
        %2409 = vmatprep.subr.bf16.mxu0 0
        %2410 = vmatpush2.bf16.msra.mxu0 %v2367
        %2411 = vmatprep.subr.bf16.mxu0 0
        %2412 = vmatpush2.bf16.msra.mxu0 %v2366
        %2413 = vmatprep.subr.bf16.mxu0 0
        %2414 = vmatpush2.bf16.msra.mxu0 %v2365
        %2415 = vmatprep.subr.bf16.mxu0 0
        %2416 = vmatpush2.bf16.msra.mxu0 %v2364
        %2417 = vmatprep.subr.bf16.mxu0 0
        %2418 = vmatpush2.bf16.msra.mxu0 %v2363
        %2419 = vmatprep.mubr.bf16.mxu0 %v2254
        %2420 = vmatmul.mubr.bf16.gmra.mxu0 %v2253
        %v2421 = vpop.f32.mrf.mxu0
        %v2422 = vadd.f32 %v2290, %v2421
        %v2423 = vpop.f32.mrf.mxu0
        %v2424 = vpop.f32.mrf.mxu0
        %v2425 = vpop.f32.mrf.mxu0
        %2426 = vdwg.mxu0
        %v2427 = vadd.f32 %v2112, %v2422
        %2428 = vst.msk [vmem:[#allocation2] sm:$0xff] %vm658, %v2427
        %p2429 = scmp.eq.s32.totalorder %s29, 1
        // Predicated region
        $region65: #{tpu_custom_call.1} parent=59 // pred_check
          %p2430 = pneg %p2429
        $region66: #{tpu_custom_call.1} parent=59 // pred_check_branch
          %2432 = sbr.rel (%p2430) target = $region68
        $region67: #{tpu_custom_call.1} parent=59 // pred_region
          %v2433 = vld [vmem:[%s8] sm:$0x1]
          %v2434 = vld [vmem:[%s8 + $0x1] sm:$0x1]
          %vm2435 = vcmask 516096
          %v2436 = vsel %vm2435, %v2427, 0.0
          %2437 = vadd.xlane.f32.xlu0 %v2436
          %v2438 = vpop.xlane.xlu0 %2437
          %v2439 = vmul.f32 %v2438, %v662
          %v2440 = vsub.f32 %v2427, %v2439
          %v2441 = vmul.f32 %v2440, %v2440
          %v2442 = vsel %vm2435, %v2441, 0.0
          %2443 = vadd.xlane.f32.xlu0 %v2442
          %v2444 = vpop.xlane.xlu0 %2443
          %v2445 = vmul.f32 %v2444, %v662
          %v2446 = vadd.f32 %v2445, 1e-05
          %v2447 = vrsqrt.pop %v2446
          %v2448 = vmul.f32 %v2440, %v2447
          %v2449 = vmul.f32 %v2448, %v2433
          %v2450 = vadd.f32 %v2449, %v2434
          %v2451 = vpack.c.bf16 %v2450, %v2450
          %v2452 = vld [vmem:[%s9] sm:$0xf]
          %v2453 = vld [vmem:[%s9 + $0x4] sm:$0xf]
          %v2454 = vld [vmem:[%s9 + $0x8] sm:$0xf]
          %v2455 = vld [vmem:[%s9 + $0xc] sm:$0xf]
          %v2456 = vld [vmem:[%s9 + $0x10] sm:$0xf]
          %v2457 = vld [vmem:[%s9 + $0x14] sm:$0xf]
          %v2458 = vld [vmem:[%s9 + $0x18] sm:$0xf]
          %v2459 = vld [vmem:[%s9 + $0x1c] sm:$0xf]
          %v2468 = vunpack.c.l.b16 %v2452
          %v2469 = vunpack.c.l.b16 %v2453
          %v2470 = vunpack.c.l.b16 %v2454
          %v2471 = vunpack.c.l.b16 %v2455
          %v2472 = vunpack.c.l.b16 %v2456
          %v2473 = vunpack.c.l.b16 %v2457
          %v2474 = vunpack.c.l.b16 %v2458
          %v2475 = vunpack.c.l.b16 %v2459
          %v2476 = vpack.c.b16 %v2469, %v2468
          %v2477 = vpack.c.b16 %v2471, %v2470
          %v2478 = vpack.c.b16 %v2473, %v2472
          %v2479 = vpack.c.b16 %v2475, %v2474
          %v2485 = vsel %vm658, %v2451, 0
          %2487 = vmatprep.subr.bf16.mxu0 0
          %2488 = vmatpush1.bf16.msra.mxu0 0
          %2489 = vmatprep.subr.bf16.mxu0 0
          %2490 = vmatpush1.bf16.msra.mxu0 0
          %2491 = vmatprep.subr.bf16.mxu0 0
          %2492 = vmatpush1.bf16.msra.mxu0 0
          %2493 = vmatprep.subr.bf16.mxu0 0
          %2494 = vmatpush1.bf16.msra.mxu0 0
          %2495 = vmatprep.subr.bf16.mxu0 0
          %2496 = vmatpush1.bf16.msra.mxu0 %v2479
          %2497 = vmatprep.subr.bf16.mxu0 0
          %2498 = vmatpush1.bf16.msra.mxu0 %v2478
          %2499 = vmatprep.subr.bf16.mxu0 0
          %2500 = vmatpush1.bf16.msra.mxu0 %v2477
          %2501 = vmatprep.subr.bf16.mxu0 0
          %2502 = vmatpush1.bf16.msra.mxu0 %v2476
          %2503 = vmatprep.subr.bf16.mxu0 0
          %2504 = vmatpush2.bf16.msra.mxu0 0
          %2505 = vmatprep.subr.bf16.mxu0 0
          %2506 = vmatpush2.bf16.msra.mxu0 0
          %2507 = vmatprep.subr.bf16.mxu0 0
          %2508 = vmatpush2.bf16.msra.mxu0 0
          %2509 = vmatprep.subr.bf16.mxu0 0
          %2510 = vmatpush2.bf16.msra.mxu0 0
          %2511 = vmatprep.subr.bf16.mxu0 0
          %2512 = vmatpush2.bf16.msra.mxu0 0
          %2513 = vmatprep.subr.bf16.mxu0 0
          %2514 = vmatpush2.bf16.msra.mxu0 0
          %2515 = vmatprep.subr.bf16.mxu0 0
          %2516 = vmatpush2.bf16.msra.mxu0 0
          %2517 = vmatprep.subr.bf16.mxu0 0
          %2518 = vmatpush2.bf16.msra.mxu0 0
          %2519 = vmatprep.mubr.bf16.mxu0 0
          %2520 = vmatmul.mubr.bf16.gmra.mxu0 %v2485
          %v2521 = vpop.f32.mrf.mxu0
          %v2522 = vadd.f32 0.0, %v2521
          %v2523 = vpop.f32.mrf.mxu0
          %v2524 = vpop.f32.mrf.mxu0
          %v2525 = vpop.f32.mrf.mxu0
          %2526 = vdwg.mxu0
          %vm2527 = vcmask 253952
          %2528 = vst.msk [vmem:[%s438] sm:$0x1] %vm2527, %v2522
        $region68: #{tpu_custom_call.1} parent=59 // pred_fallthru
          _
        %s2529 = sand.u32 %s284, 1
        %s2530 = scalar_lea.sflag [#allocation4], %s2529
        %s2531 = sand.u32 %s284, 1
        %s2532 = scalar_lea.vmem [#allocation3], %s2531
        // Predicated region
        $region69: #{tpu_custom_call.1} parent=59 // pred_check
          %p2533 = pneg %p294
        $region70: #{tpu_custom_call.1} parent=59 // pred_check_branch
          %2535 = sbr.rel (%p2533) target = $region72
        $region71: #{tpu_custom_call.1} parent=59 // pred_region
          %s2537 = ssub.s32 16, 16
          %2538 = vsyncadd %s2530, %s2537
          %s2539 = smul.addr %s28, 16
          %s2540 = scalar_lea.hbm %s10, %s2539
          %s2542 = sshll.u32 %s2532, 4
          %s2543 = int_to_ptr.vmem [resolvable:$true] %s2542
          %2545 = dma.vmem_to_hbm [thread:$0]  %s2543, 16, %s2540, %s2530
        $region72: #{tpu_custom_call.1} parent=59 // pred_fallthru
          _
      $region60: #{tpu_custom_call.1} parent=5 // pred_fallthru
        _
      %p2546 = scmp.le.s32.totalorder 2, %s19
      // Predicated region
      $region73: #{tpu_custom_call.1} parent=5 // pred_check
        %p2547 = pneg %p2546
      $region74: #{tpu_custom_call.1} parent=5 // pred_check_branch
        %2549 = sbr.rel (%p2547) target = $region76
      $region75: #{tpu_custom_call.1} parent=5 // pred_region
        %s2550 = ssub.s32 %s19, 2
        // Predicated region
        $region77: #{tpu_custom_call.1} parent=75 // pred_check
          %p2551 = pneg %p300
        $region78: #{tpu_custom_call.1} parent=75 // pred_check_branch
          %2553 = sbr.rel (%p2551) target = $region80
        $region79: #{tpu_custom_call.1} parent=75 // pred_region
          %s2554 = sand.u32 %s285, 1
          %s2555 = scalar_lea.sflag [#allocation4], %s2554
          %s2556 = sand.u32 %s285, 1
          %s2557 = scalar_lea.vmem [#allocation3], %s2556
          %2558 = dma.done %s2555, 16
        $region80: #{tpu_custom_call.1} parent=75 // pred_fallthru
          _
      $region76: #{tpu_custom_call.1} parent=5 // pred_fallthru
        _
    $region6: #{tpu_custom_call.1} parent=1 // loop_footer
      %s23 = sadd.s32 1, %s19
    $region7: #{tpu_custom_call.1} parent=1 // loop_footer_branch
      %18 = sbr.rel target = $region3
    $region8: #{tpu_custom_call.1} parent=1 // loop_exit
      _
    %2559 = vsyncpa [#allocation4], 1
    %s2560 = scalar_lea.sflag [#allocation4], 1
    %2561 = vsyncpa %s2560, 1

</llo_original>
